<compile_context>
chip_gen: v7x
topology: tpu7x:2x2x1
jax: 0.10.0
libtpu: 0.0.40
codegen_flags: <defaults>
</compile_context>

<pallas_src>
import math
import functools

import jax
import jax.numpy as jnp
from jax.experimental import pallas as pl
from jax.experimental.pallas import tpu as pltpu
from jax.scipy.special import digamma as jsp_digamma, gammaln as jsp_gammaln


# ----------------------------- in-kernel special functions -----------------------------

def _digamma_shifted(x, shift):
    """digamma(x) with `shift` recurrence steps folded into ONE EUP divide.

    psi(x) = psi(x + shift) - sum_{k=0}^{shift-1} 1/(x+k); the reciprocal sum is
    accumulated as a single fraction num/den (VALU muls/adds) and divided once.
    Needs x >= 1 and x + shift >= ~9 for the asymptotic series.  den = prod(x+k)
    stays in f32 range for x < ~6e4 (softplus evidences are far below this).
    """
    z = x + float(shift)
    if shift > 0:
        num = jnp.ones_like(x)
        den = x
        t = x
        for _ in range(shift - 1):
            t = t + 1.0
            num = num * t + den
            den = den * t
        acc = num / den          # single EUP divide instead of `shift` reciprocals
    else:
        acc = 0.0
    inv = 1.0 / z
    inv2 = inv * inv
    series = jnp.log(z) - 0.5 * inv - inv2 * (
        1.0 / 12.0 - inv2 * (1.0 / 120.0 - inv2 * (1.0 / 252.0)))
    return series - acc


def _lgamma_shifted(x, shift):
    """log Gamma(x) with the shift folded into ONE EUP log.

    lgamma(x) = lgamma(x+shift) - log(prod_{k=0}^{shift-1}(x+k)); the running product
    is VALU-only, then a single log.  Stirling series valid for z >= ~9.  Product of
    8 shifted terms overflows f32 only for x >~ 6e4, which softplus evidences never
    reach.
    """
    z = x + float(shift)
    if shift > 0:
        prod = x
        t = x
        for _ in range(shift - 1):
            t = t + 1.0
            prod = prod * t
        acc = jnp.log(prod)      # single EUP log instead of `shift` logs
    else:
        acc = 0.0
    inv = 1.0 / z
    inv2 = inv * inv
    stirling = ((z - 0.5) * jnp.log(z) - z + 0.5 * math.log(2.0 * math.pi)
                + inv * (1.0 / 12.0 - inv2 * (1.0 / 360.0 - inv2 * (1.0 / 1260.0))))
    return stirling - acc


# ------------------------------------ Pallas kernel ------------------------------------

def _rcml_kernel(sc_ref, y_ref, *refs, num_views, num_classes, block_b,
                 batch_valid, needs_mask):
    V, C, Nb = num_views, num_classes, block_b
    ev_refs = refs[:V]
    ea_ref = refs[V]
    loss_ref = refs[V + 1]

    annealing = sc_ref[0]                 # SMEM scalar (runtime; no recompiles per epoch)
    gamma = sc_ref[1]                     # SMEM scalar

    # Transposed layout: classes on sublanes (axis -2), batch samples on lanes (-1).
    evs = [ev_refs[v][...] for v in range(V)]

    # --- evidence aggregation: running pairwise average (exactly as in forward()) ---
    ea = evs[0]
    for v in range(1, V):
        ea = (evs[v] + ea) * 0.5
    ea_ref[...] = ea

    # One-hot mask built in-kernel from int labels.
    class_iota = jax.lax.broadcasted_iota(jnp.int32, (C, Nb), 0)
    y = (class_iota == y_ref[...]).astype(jnp.float32)            # [C, Nb]
    Y = y[None]                                                    # [1, C, Nb]
    one_m_y = 1.0 - Y

    # All V views plus aggregated evidence processed in ONE batched pass.
    alpha = jnp.stack(evs + [ea], axis=0) + 1.0                    # [V+1, C, Nb]
    S = jnp.sum(alpha, axis=1, keepdims=True)                      # [V+1, 1, Nb]

    shift_big = max(0, 9 - C)   # S and sum(kl_alpha) are >= C, so little/no shifting
    dgA = _digamma_shifted(alpha, 8)                               # [V+1, C, Nb]
    lgA = _lgamma_shifted(alpha, 8)                                # [V+1, C, Nb]
    dgS = _digamma_shifted(S, shift_big)                           # [V+1, 1, Nb]

    # EDL digamma loss.  kl_alpha = where(y, 1, alpha) -> transcendentals reused:
    #   lgamma(kl_alpha) = (1-y) * lgamma(alpha)            (lgamma(1) = 0)
    #   (kl_alpha-1)*digamma(kl_alpha) = (1-y)*(alpha-1)*digamma(alpha)
    term_a = jnp.sum(Y * (dgS - dgA), axis=1, keepdims=True)       # [V+1, 1, Nb]
    ka_m1 = one_m_y * (alpha - 1.0)                                # kl_alpha - 1
    sum_ka = jnp.sum(ka_m1, axis=1, keepdims=True) + float(C)
    lg_ka_sum = jnp.sum(one_m_y * lgA, axis=1, keepdims=True)
    dg_sum_ka = _digamma_shifted(sum_ka, shift_big)
    lg_sum_ka = _lgamma_shifted(sum_ka, shift_big)
    first = lg_sum_ka - lg_ka_sum - math.lgamma(num_classes)
    second = jnp.sum(ka_m1 * (dgA - dg_sum_ka), axis=1, keepdims=True)
    edl = term_a + annealing * (first + second)                    # [V+1, 1, Nb]
    acc_loss = jnp.sum(edl, axis=0) * (1.0 / float(V + 1))         # [1, Nb]

    # --- degree-of-conflict loss, per sample (lane) ---
    if V > 1:
        alpha_v = alpha[:V]
        inv_S = 1.0 / S[:V]
        p = alpha_v * inv_S                                        # [V, C, Nb]
        omu = 1.0 - float(C) * inv_S                               # [V, 1, Nb] (hoisted)
        scale = 0.5 / float(V - 1)
        dc = jnp.zeros((1, Nb), jnp.float32)
        for i in range(V):
            pd = jnp.sum(jnp.abs(p - p[i]), axis=1, keepdims=True) * scale  # [V,1,Nb]
            dc = dc + jnp.sum(pd * (omu * omu[i]), axis=0)                  # [1, Nb]
    else:
        # TODO(synk): reference divides by (num_views - 1); undefined for a single view.
        dc = jnp.zeros((1, Nb), jnp.float32)

    per_sample = acc_loss + gamma * dc                             # [1, Nb]
    if needs_mask:
        col = (jax.lax.broadcasted_iota(jnp.int32, (1, Nb), 1)
               + pl.program_id(0) * Nb)
        per_sample = jnp.where(col < batch_valid, per_sample, 0.0)
    loss_ref[...] = per_sample


# -------------------------------------- wrapper ----------------------------------------

def rcml_forward(evidences, y, global_step, *, num_views, num_classes,
                 lambda_epochs, gamma):
    B = evidences[0].shape[0]
    C = num_classes

    # Batch tiling: one block when small; otherwise 512-sample blocks (multiple of
    # 128 lanes -> dense stores; [(V+1), C, 512] f32 intermediates stay well under the
    # 32 MiB default scoped VMEM and v7x's 64 MiB physical VMEM, double-buffering
    # included).  "parallel" semantics lets the two v7x TensorCores split the batch.
    if B <= 1024:
        block_b, b_pad = B, B
    else:
        block_b = 512
        b_pad = ((B + block_b - 1) // block_b) * block_b

    # Lane-dense layout: transpose so batch sits on lanes, classes on sublanes.
    def prep(e):
        e = jnp.transpose(e.astype(jnp.float32))                   # [C, B]
        if b_pad != B:
            e = jnp.pad(e, ((0, 0), (0, b_pad - B)))               # alpha=1 rows, masked
        return e
    ev_t = [prep(e) for e in evidences]

    y_row = y.astype(jnp.int32).reshape(1, B)
    if b_pad != B:
        y_row = jnp.pad(y_row, ((0, 0), (0, b_pad - B)))

    annealing_coef = min(1.0, float(global_step) / float(lambda_epochs))
    scalars = jnp.array([annealing_coef, float(gamma)], dtype=jnp.float32)

    kernel = functools.partial(
        _rcml_kernel, num_views=num_views, num_classes=num_classes,
        block_b=block_b, batch_valid=B, needs_mask=(b_pad != B))

    ea_t, loss_rows = pl.pallas_call(
        kernel,
        out_shape=(jax.ShapeDtypeStruct((C, b_pad), jnp.float32),
                   jax.ShapeDtypeStruct((1, b_pad), jnp.float32)),
        grid=(b_pad // block_b,),
        in_specs=[pl.BlockSpec(memory_space=pltpu.MemorySpace.SMEM),     # scalars
                  pl.BlockSpec((1, block_b), lambda b: (0, b))]          # labels
                 + [pl.BlockSpec((C, block_b), lambda b: (0, b))         # evidences
                    for _ in range(num_views)],
        out_specs=(pl.BlockSpec((C, block_b), lambda b: (0, b)),         # evidence_a
                   pl.BlockSpec((1, block_b), lambda b: (0, b))),        # per-sample loss
        compiler_params=pltpu.CompilerParams(
            dimension_semantics=("parallel",)),
    )(scalars, y_row, *ev_t)

    evidence_a = jnp.transpose(ea_t[:, :B])                        # [B, C]
    loss = jnp.sum(loss_rows) / float(B)                           # batch mean (padded=0)
    return evidences, evidence_a, loss


# ------------------------------- plain-JAX reference -----------------------------------

def rcml_reference(evidences, y, global_step, num_views, num_classes,
                   lambda_epochs, gamma):
    ev = [e.astype(jnp.float32) for e in evidences]
    y1 = jax.nn.one_hot(y, num_classes, dtype=jnp.float32)
    annealing = min(1.0, float(global_step) / float(lambda_epochs))

    def edl(alpha):
        S = jnp.sum(alpha, axis=1, keepdims=True)
        A = jnp.sum(y1 * (jsp_digamma(S) - jsp_digamma(alpha)), axis=1, keepdims=True)
        ka = (alpha - 1.0) * (1.0 - y1) + 1.0
        ska = jnp.sum(ka, axis=1, keepdims=True)
        first = (jsp_gammaln(ska) - jnp.sum(jsp_gammaln(ka), axis=1, keepdims=True)
                 - jsp_gammaln(jnp.float32(num_classes)))
        second = jnp.sum((ka - 1.0) * (jsp_digamma(ka) - jsp_digamma(ska)),
                         axis=1, keepdims=True)
        return jnp.mean(A + annealing * (first + second))

    ea = ev[0]
    for i in range(1, num_views):
        ea = (ev[i] + ea) / 2.0
    loss_acc = edl(ea + 1.0)
    for v in range(num_views):
        loss_acc = loss_acc + edl(ev[v] + 1.0)
    loss_acc = loss_acc / (num_views + 1)

    evs = jnp.stack(ev, 0)
    alpha = evs + 1.0
    S = jnp.sum(alpha, axis=2, keepdims=True)
    p = alpha / S
    u = num_classes / S[..., 0]
    dc_sum = 0.0
    for i in range(num_views):
        pd = jnp.sum(jnp.abs(p - p[i]) / 2.0, axis=2) / (num_views - 1)
        cc = (1.0 - u) * (1.0 - u[i])
        dc_sum = dc_sum + jnp.sum(pd * cc, axis=0)
    return ea, loss_acc + gamma * jnp.mean(dc_sum)


# ---------------------------------------- main ------------------------------------------

if __name__ == "__main__":
    key = jax.random.PRNGKey(0)
    num_views, batch, num_classes = 3, 8, 10
    lambda_epochs, gamma = 50, 1.0
    global_step = 7

    keys = jax.random.split(key, num_views + 1)
    # Evidences are non-negative (softplus outputs in RCML).
    evidences = [3.0 * jax.nn.softplus(jax.random.normal(keys[i], (batch, num_classes),
                                                         jnp.float32))
                 for i in range(num_views)]
    y = jax.random.randint(keys[num_views], (batch,), 0, num_classes)

    evs_out, evidence_a, loss = rcml_forward(
        evidences, y, global_step, num_views=num_views, num_classes=num_classes,
        lambda_epochs=lambda_epochs, gamma=gamma)
    jax.block_until_ready((evidence_a, loss))

    ea_ref, loss_ref = rcml_reference(evidences, y, global_step, num_views,
                                      num_classes, lambda_epochs, gamma)
    assert jnp.allclose(evidence_a, ea_ref, atol=1e-5, rtol=1e-5)
    assert jnp.allclose(loss, loss_ref, atol=2e-3, rtol=2e-3)
    print("KERNEL_OK")
</pallas_src>

<mosaic_0001>
module attributes {stable_mosaic.version = 11 : i64} {
  func.func @_rcml_kernel(%arg0: i32, %arg1: memref<2xf32, #tpu.memory_space<smem>>, %arg2: memref<1x8xi32, #tpu.memory_space<vmem>>, %arg3: memref<10x8xf32, #tpu.memory_space<vmem>>, %arg4: memref<10x8xf32, #tpu.memory_space<vmem>>, %arg5: memref<10x8xf32, #tpu.memory_space<vmem>>, %arg6: memref<10x8xf32, #tpu.memory_space<vmem>>, %arg7: memref<1x8xf32, #tpu.memory_space<vmem>>) attributes {dimension_semantics = [#tpu.dimension_semantics<parallel>], iteration_bounds = array<i64: 1>, scalar_prefetch = 0 : i64, scratch_operands = 0 : i64, tpu.core_type = #tpu.core_type<tc>, window_params = [{transform_indices = @transform_0, window_bounds = array<i64: 2>}, {transform_indices = @transform_1, window_bounds = array<i64: 1, 8>}, {transform_indices = @transform_2, window_bounds = array<i64: 10, 8>}, {transform_indices = @transform_3, window_bounds = array<i64: 10, 8>}, {transform_indices = @transform_4, window_bounds = array<i64: 10, 8>}, {transform_indices = @transform_5, window_bounds = array<i64: 10, 8>}, {transform_indices = @transform_6, window_bounds = array<i64: 1, 8>}]} {
    %c0 = arith.constant 0 : index
    %0 = memref.load %arg1[%c0] : memref<2xf32, #tpu.memory_space<smem>>
    %c1 = arith.constant 1 : index
    %1 = memref.load %arg1[%c1] : memref<2xf32, #tpu.memory_space<smem>>
    %c0_0 = arith.constant 0 : index
    %c0_1 = arith.constant 0 : index
    %2 = vector.load %arg3[%c0_0, %c0_1] : memref<10x8xf32, #tpu.memory_space<vmem>>, vector<10x8xf32>
    %c0_2 = arith.constant 0 : index
    %c0_3 = arith.constant 0 : index
    %3 = vector.load %arg4[%c0_2, %c0_3] : memref<10x8xf32, #tpu.memory_space<vmem>>, vector<10x8xf32>
    %c0_4 = arith.constant 0 : index
    %c0_5 = arith.constant 0 : index
    %4 = vector.load %arg5[%c0_4, %c0_5] : memref<10x8xf32, #tpu.memory_space<vmem>>, vector<10x8xf32>
    %5 = arith.addf %3, %2 : vector<10x8xf32>
    %cst = arith.constant 5.000000e-01 : f32
    %6 = vector.broadcast %cst : f32 to vector<10x8xf32>
    %7 = arith.mulf %5, %6 : vector<10x8xf32>
    %8 = arith.addf %4, %7 : vector<10x8xf32>
    %cst_6 = arith.constant 5.000000e-01 : f32
    %9 = vector.broadcast %cst_6 : f32 to vector<10x8xf32>
    %10 = arith.mulf %8, %9 : vector<10x8xf32>
    %c0_7 = arith.constant 0 : index
    %c0_8 = arith.constant 0 : index
    %11 = vector.load %arg6[%c0_7, %c0_8] : memref<10x8xf32, #tpu.memory_space<vmem>>, vector<10x8xf32>
    tpu.vector_store %arg6[%c0_7, %c0_8], %10 {strides = array<i32>} : memref<10x8xf32, #tpu.memory_space<vmem>>, vector<10x8xf32>,
    %12 = tpu.iota {dimensions = array<i32: 0>} : vector<10x8xi32>
    %c0_9 = arith.constant 0 : index
    %c0_10 = arith.constant 0 : index
    %13 = vector.load %arg2[%c0_9, %c0_10] : memref<1x8xi32, #tpu.memory_space<vmem>>, vector<1x8xi32>
    %14 = vector.broadcast %13 : vector<1x8xi32> to vector<10x8xi32>
    %15 = arith.cmpi eq, %12, %14 : vector<10x8xi32>
    %16 = arith.extui %15 : vector<10x8xi1> to vector<10x8xi32>
    %17 = arith.sitofp %16 : vector<10x8xi32> to vector<10x8xf32>
    %18 = vector.shape_cast %17 : vector<10x8xf32> to vector<1x10x8xf32>
    %cst_11 = arith.constant 1.000000e+00 : f32
    %19 = vector.broadcast %cst_11 : f32 to vector<1x10x8xf32>
    %20 = arith.subf %19, %18 : vector<1x10x8xf32>
    %21 = vector.shape_cast %2 : vector<10x8xf32> to vector<1x10x8xf32>
    %22 = vector.shape_cast %3 : vector<10x8xf32> to vector<1x10x8xf32>
    %23 = vector.shape_cast %4 : vector<10x8xf32> to vector<1x10x8xf32>
    %24 = vector.shape_cast %10 : vector<10x8xf32> to vector<1x10x8xf32>
    %25 = tpu.concatenate %21, %22, %23, %24 in 0 : vector<1x10x8xf32>, vector<1x10x8xf32>, vector<1x10x8xf32>, vector<1x10x8xf32> -> vector<4x10x8xf32>
    %cst_12 = arith.constant 1.000000e+00 : f32
    %26 = vector.broadcast %cst_12 : f32 to vector<4x10x8xf32>
    %27 = arith.addf %25, %26 : vector<4x10x8xf32>
    %cst_13 = arith.constant dense<0.000000e+00> : vector<4x8xf32>
    %28 = vector.multi_reduction <add>, %27, %cst_13 [1] : vector<4x10x8xf32> to vector<4x8xf32>
    %29 = vector.shape_cast %28 : vector<4x8xf32> to vector<4x1x8xf32>
    %cst_14 = arith.constant 8.000000e+00 : f32
    %30 = vector.broadcast %cst_14 : f32 to vector<4x10x8xf32>
    %31 = arith.addf %27, %30 : vector<4x10x8xf32>
    %cst_15 = arith.constant 1.000000e+00 : f32
    %32 = vector.broadcast %cst_15 : f32 to vector<4x10x8xf32>
    %cst_16 = arith.constant 1.000000e+00 : f32
    %33 = vector.broadcast %cst_16 : f32 to vector<4x10x8xf32>
    %34 = arith.addf %27, %33 : vector<4x10x8xf32>
    %35 = arith.mulf %32, %34 : vector<4x10x8xf32>
    %36 = arith.addf %35, %27 : vector<4x10x8xf32>
    %37 = arith.mulf %27, %34 : vector<4x10x8xf32>
    %cst_17 = arith.constant 1.000000e+00 : f32
    %38 = vector.broadcast %cst_17 : f32 to vector<4x10x8xf32>
    %39 = arith.addf %34, %38 : vector<4x10x8xf32>
    %40 = arith.mulf %36, %39 : vector<4x10x8xf32>
    %41 = arith.addf %40, %37 : vector<4x10x8xf32>
    %42 = arith.mulf %37, %39 : vector<4x10x8xf32>
    %cst_18 = arith.constant 1.000000e+00 : f32
    %43 = vector.broadcast %cst_18 : f32 to vector<4x10x8xf32>
    %44 = arith.addf %39, %43 : vector<4x10x8xf32>
    %45 = arith.mulf %41, %44 : vector<4x10x8xf32>
    %46 = arith.addf %45, %42 : vector<4x10x8xf32>
    %47 = arith.mulf %42, %44 : vector<4x10x8xf32>
    %cst_19 = arith.constant 1.000000e+00 : f32
    %48 = vector.broadcast %cst_19 : f32 to vector<4x10x8xf32>
    %49 = arith.addf %44, %48 : vector<4x10x8xf32>
    %50 = arith.mulf %46, %49 : vector<4x10x8xf32>
    %51 = arith.addf %50, %47 : vector<4x10x8xf32>
    %52 = arith.mulf %47, %49 : vector<4x10x8xf32>
    %cst_20 = arith.constant 1.000000e+00 : f32
    %53 = vector.broadcast %cst_20 : f32 to vector<4x10x8xf32>
    %54 = arith.addf %49, %53 : vector<4x10x8xf32>
    %55 = arith.mulf %51, %54 : vector<4x10x8xf32>
    %56 = arith.addf %55, %52 : vector<4x10x8xf32>
    %57 = arith.mulf %52, %54 : vector<4x10x8xf32>
    %cst_21 = arith.constant 1.000000e+00 : f32
    %58 = vector.broadcast %cst_21 : f32 to vector<4x10x8xf32>
    %59 = arith.addf %54, %58 : vector<4x10x8xf32>
    %60 = arith.mulf %56, %59 : vector<4x10x8xf32>
    %61 = arith.addf %60, %57 : vector<4x10x8xf32>
    %62 = arith.mulf %57, %59 : vector<4x10x8xf32>
    %cst_22 = arith.constant 1.000000e+00 : f32
    %63 = vector.broadcast %cst_22 : f32 to vector<4x10x8xf32>
    %64 = arith.addf %59, %63 : vector<4x10x8xf32>
    %65 = arith.mulf %61, %64 : vector<4x10x8xf32>
    %66 = arith.addf %65, %62 : vector<4x10x8xf32>
    %67 = arith.mulf %62, %64 : vector<4x10x8xf32>
    %68 = arith.divf %66, %67 : vector<4x10x8xf32>
    %cst_23 = arith.constant 1.000000e+00 : f32
    %69 = vector.broadcast %cst_23 : f32 to vector<4x10x8xf32>
    %70 = arith.divf %69, %31 : vector<4x10x8xf32>
    %71 = arith.mulf %70, %70 : vector<4x10x8xf32>
    %72 = math.log %31 : vector<4x10x8xf32>
    %cst_24 = arith.constant 5.000000e-01 : f32
    %73 = vector.broadcast %cst_24 : f32 to vector<4x10x8xf32>
    %74 = arith.mulf %73, %70 : vector<4x10x8xf32>
    %75 = arith.subf %72, %74 : vector<4x10x8xf32>
    %cst_25 = arith.constant 0.0039682542 : f32
    %76 = vector.broadcast %cst_25 : f32 to vector<4x10x8xf32>
    %77 = arith.mulf %71, %76 : vector<4x10x8xf32>
    %cst_26 = arith.constant 0.00833333377 : f32
    %78 = vector.broadcast %cst_26 : f32 to vector<4x10x8xf32>
    %79 = arith.subf %78, %77 : vector<4x10x8xf32>
    %80 = arith.mulf %71, %79 : vector<4x10x8xf32>
    %cst_27 = arith.constant 0.0833333358 : f32
    %81 = vector.broadcast %cst_27 : f32 to vector<4x10x8xf32>
    %82 = arith.subf %81, %80 : vector<4x10x8xf32>
    %83 = arith.mulf %71, %82 : vector<4x10x8xf32>
    %84 = arith.subf %75, %83 : vector<4x10x8xf32>
    %85 = arith.subf %84, %68 : vector<4x10x8xf32>
    %cst_28 = arith.constant 8.000000e+00 : f32
    %86 = vector.broadcast %cst_28 : f32 to vector<4x10x8xf32>
    %87 = arith.addf %27, %86 : vector<4x10x8xf32>
    %cst_29 = arith.constant 1.000000e+00 : f32
    %88 = vector.broadcast %cst_29 : f32 to vector<4x10x8xf32>
    %89 = arith.addf %27, %88 : vector<4x10x8xf32>
    %90 = arith.mulf %27, %89 : vector<4x10x8xf32>
    %cst_30 = arith.constant 1.000000e+00 : f32
    %91 = vector.broadcast %cst_30 : f32 to vector<4x10x8xf32>
    %92 = arith.addf %89, %91 : vector<4x10x8xf32>
    %93 = arith.mulf %90, %92 : vector<4x10x8xf32>
    %cst_31 = arith.constant 1.000000e+00 : f32
    %94 = vector.broadcast %cst_31 : f32 to vector<4x10x8xf32>
    %95 = arith.addf %92, %94 : vector<4x10x8xf32>
    %96 = arith.mulf %93, %95 : vector<4x10x8xf32>
    %cst_32 = arith.constant 1.000000e+00 : f32
    %97 = vector.broadcast %cst_32 : f32 to vector<4x10x8xf32>
    %98 = arith.addf %95, %97 : vector<4x10x8xf32>
    %99 = arith.mulf %96, %98 : vector<4x10x8xf32>
    %cst_33 = arith.constant 1.000000e+00 : f32
    %100 = vector.broadcast %cst_33 : f32 to vector<4x10x8xf32>
    %101 = arith.addf %98, %100 : vector<4x10x8xf32>
    %102 = arith.mulf %99, %101 : vector<4x10x8xf32>
    %cst_34 = arith.constant 1.000000e+00 : f32
    %103 = vector.broadcast %cst_34 : f32 to vector<4x10x8xf32>
    %104 = arith.addf %101, %103 : vector<4x10x8xf32>
    %105 = arith.mulf %102, %104 : vector<4x10x8xf32>
    %cst_35 = arith.constant 1.000000e+00 : f32
    %106 = vector.broadcast %cst_35 : f32 to vector<4x10x8xf32>
    %107 = arith.addf %104, %106 : vector<4x10x8xf32>
    %108 = arith.mulf %105, %107 : vector<4x10x8xf32>
    %109 = math.log %108 : vector<4x10x8xf32>
    %cst_36 = arith.constant 1.000000e+00 : f32
    %110 = vector.broadcast %cst_36 : f32 to vector<4x10x8xf32>
    %111 = arith.divf %110, %87 : vector<4x10x8xf32>
    %112 = arith.mulf %111, %111 : vector<4x10x8xf32>
    %cst_37 = arith.constant 5.000000e-01 : f32
    %113 = vector.broadcast %cst_37 : f32 to vector<4x10x8xf32>
    %114 = arith.subf %87, %113 : vector<4x10x8xf32>
    %115 = math.log %87 : vector<4x10x8xf32>
    %116 = arith.mulf %114, %115 : vector<4x10x8xf32>
    %117 = arith.subf %116, %87 : vector<4x10x8xf32>
    %cst_38 = arith.constant 0.918938517 : f32
    %118 = vector.broadcast %cst_38 : f32 to vector<4x10x8xf32>
    %119 = arith.addf %117, %118 : vector<4x10x8xf32>
    %cst_39 = arith.constant 7.93650805E-4 : f32
    %120 = vector.broadcast %cst_39 : f32 to vector<4x10x8xf32>
    %121 = arith.mulf %112, %120 : vector<4x10x8xf32>
    %cst_40 = arith.constant 0.00277777785 : f32
    %122 = vector.broadcast %cst_40 : f32 to vector<4x10x8xf32>
    %123 = arith.subf %122, %121 : vector<4x10x8xf32>
    %124 = arith.mulf %112, %123 : vector<4x10x8xf32>
    %cst_41 = arith.constant 0.0833333358 : f32
    %125 = vector.broadcast %cst_41 : f32 to vector<4x10x8xf32>
    %126 = arith.subf %125, %124 : vector<4x10x8xf32>
    %127 = arith.mulf %111, %126 : vector<4x10x8xf32>
    %128 = arith.addf %119, %127 : vector<4x10x8xf32>
    %129 = arith.subf %128, %109 : vector<4x10x8xf32>
    %cst_42 = arith.constant 0.000000e+00 : f32
    %130 = vector.broadcast %cst_42 : f32 to vector<4x1x8xf32>
    %131 = arith.addf %29, %130 : vector<4x1x8xf32>
    %cst_43 = arith.constant 1.000000e+00 : f32
    %132 = vector.broadcast %cst_43 : f32 to vector<4x1x8xf32>
    %133 = arith.divf %132, %131 : vector<4x1x8xf32>
    %134 = arith.mulf %133, %133 : vector<4x1x8xf32>
    %135 = math.log %131 : vector<4x1x8xf32>
    %cst_44 = arith.constant 5.000000e-01 : f32
    %136 = vector.broadcast %cst_44 : f32 to vector<4x1x8xf32>
    %137 = arith.mulf %136, %133 : vector<4x1x8xf32>
    %138 = arith.subf %135, %137 : vector<4x1x8xf32>
    %cst_45 = arith.constant 0.0039682542 : f32
    %139 = vector.broadcast %cst_45 : f32 to vector<4x1x8xf32>
    %140 = arith.mulf %134, %139 : vector<4x1x8xf32>
    %cst_46 = arith.constant 0.00833333377 : f32
    %141 = vector.broadcast %cst_46 : f32 to vector<4x1x8xf32>
    %142 = arith.subf %141, %140 : vector<4x1x8xf32>
    %143 = arith.mulf %134, %142 : vector<4x1x8xf32>
    %cst_47 = arith.constant 0.0833333358 : f32
    %144 = vector.broadcast %cst_47 : f32 to vector<4x1x8xf32>
    %145 = arith.subf %144, %143 : vector<4x1x8xf32>
    %146 = arith.mulf %134, %145 : vector<4x1x8xf32>
    %147 = arith.subf %138, %146 : vector<4x1x8xf32>
    %cst_48 = arith.constant 0.000000e+00 : f32
    %148 = vector.broadcast %cst_48 : f32 to vector<4x1x8xf32>
    %149 = arith.subf %147, %148 : vector<4x1x8xf32>
    %150 = vector.broadcast %149 : vector<4x1x8xf32> to vector<4x10x8xf32>
    %151 = arith.subf %150, %85 : vector<4x10x8xf32>
    %152 = vector.broadcast %18 : vector<1x10x8xf32> to vector<4x10x8xf32>
    %153 = arith.mulf %152, %151 : vector<4x10x8xf32>
    %cst_49 = arith.constant dense<0.000000e+00> : vector<4x8xf32>
    %154 = vector.multi_reduction <add>, %153, %cst_49 [1] : vector<4x10x8xf32> to vector<4x8xf32>
    %155 = vector.shape_cast %154 : vector<4x8xf32> to vector<4x1x8xf32>
    %cst_50 = arith.constant 1.000000e+00 : f32
    %156 = vector.broadcast %cst_50 : f32 to vector<4x10x8xf32>
    %157 = arith.subf %27, %156 : vector<4x10x8xf32>
    %158 = vector.broadcast %20 : vector<1x10x8xf32> to vector<4x10x8xf32>
    %159 = arith.mulf %158, %157 : vector<4x10x8xf32>
    %cst_51 = arith.constant dense<0.000000e+00> : vector<4x8xf32>
    %160 = vector.multi_reduction <add>, %159, %cst_51 [1] : vector<4x10x8xf32> to vector<4x8xf32>
    %161 = vector.shape_cast %160 : vector<4x8xf32> to vector<4x1x8xf32>
    %cst_52 = arith.constant 1.000000e+01 : f32
    %162 = vector.broadcast %cst_52 : f32 to vector<4x1x8xf32>
    %163 = arith.addf %161, %162 : vector<4x1x8xf32>
    %164 = vector.broadcast %20 : vector<1x10x8xf32> to vector<4x10x8xf32>
    %165 = arith.mulf %164, %129 : vector<4x10x8xf32>
    %cst_53 = arith.constant dense<0.000000e+00> : vector<4x8xf32>
    %166 = vector.multi_reduction <add>, %165, %cst_53 [1] : vector<4x10x8xf32> to vector<4x8xf32>
    %167 = vector.shape_cast %166 : vector<4x8xf32> to vector<4x1x8xf32>
    %cst_54 = arith.constant 0.000000e+00 : f32
    %168 = vector.broadcast %cst_54 : f32 to vector<4x1x8xf32>
    %169 = arith.addf %163, %168 : vector<4x1x8xf32>
    %cst_55 = arith.constant 1.000000e+00 : f32
    %170 = vector.broadcast %cst_55 : f32 to vector<4x1x8xf32>
    %171 = arith.divf %170, %169 : vector<4x1x8xf32>
    %172 = arith.mulf %171, %171 : vector<4x1x8xf32>
    %173 = math.log %169 : vector<4x1x8xf32>
    %cst_56 = arith.constant 5.000000e-01 : f32
    %174 = vector.broadcast %cst_56 : f32 to vector<4x1x8xf32>
    %175 = arith.mulf %174, %171 : vector<4x1x8xf32>
    %176 = arith.subf %173, %175 : vector<4x1x8xf32>
    %cst_57 = arith.constant 0.0039682542 : f32
    %177 = vector.broadcast %cst_57 : f32 to vector<4x1x8xf32>
    %178 = arith.mulf %172, %177 : vector<4x1x8xf32>
    %cst_58 = arith.constant 0.00833333377 : f32
    %179 = vector.broadcast %cst_58 : f32 to vector<4x1x8xf32>
    %180 = arith.subf %179, %178 : vector<4x1x8xf32>
    %181 = arith.mulf %172, %180 : vector<4x1x8xf32>
    %cst_59 = arith.constant 0.0833333358 : f32
    %182 = vector.broadcast %cst_59 : f32 to vector<4x1x8xf32>
    %183 = arith.subf %182, %181 : vector<4x1x8xf32>
    %184 = arith.mulf %172, %183 : vector<4x1x8xf32>
    %185 = arith.subf %176, %184 : vector<4x1x8xf32>
    %cst_60 = arith.constant 0.000000e+00 : f32
    %186 = vector.broadcast %cst_60 : f32 to vector<4x1x8xf32>
    %187 = arith.subf %185, %186 : vector<4x1x8xf32>
    %cst_61 = arith.constant 0.000000e+00 : f32
    %188 = vector.broadcast %cst_61 : f32 to vector<4x1x8xf32>
    %189 = arith.addf %163, %188 : vector<4x1x8xf32>
    %cst_62 = arith.constant 1.000000e+00 : f32
    %190 = vector.broadcast %cst_62 : f32 to vector<4x1x8xf32>
    %191 = arith.divf %190, %189 : vector<4x1x8xf32>
    %192 = arith.mulf %191, %191 : vector<4x1x8xf32>
    %cst_63 = arith.constant 5.000000e-01 : f32
    %193 = vector.broadcast %cst_63 : f32 to vector<4x1x8xf32>
    %194 = arith.subf %189, %193 : vector<4x1x8xf32>
    %195 = math.log %189 : vector<4x1x8xf32>
    %196 = arith.mulf %194, %195 : vector<4x1x8xf32>
    %197 = arith.subf %196, %189 : vector<4x1x8xf32>
    %cst_64 = arith.constant 0.918938517 : f32
    %198 = vector.broadcast %cst_64 : f32 to vector<4x1x8xf32>
    %199 = arith.addf %197, %198 : vector<4x1x8xf32>
    %cst_65 = arith.constant 7.93650805E-4 : f32
    %200 = vector.broadcast %cst_65 : f32 to vector<4x1x8xf32>
    %201 = arith.mulf %192, %200 : vector<4x1x8xf32>
    %cst_66 = arith.constant 0.00277777785 : f32
    %202 = vector.broadcast %cst_66 : f32 to vector<4x1x8xf32>
    %203 = arith.subf %202, %201 : vector<4x1x8xf32>
    %204 = arith.mulf %192, %203 : vector<4x1x8xf32>
    %cst_67 = arith.constant 0.0833333358 : f32
    %205 = vector.broadcast %cst_67 : f32 to vector<4x1x8xf32>
    %206 = arith.subf %205, %204 : vector<4x1x8xf32>
    %207 = arith.mulf %191, %206 : vector<4x1x8xf32>
    %208 = arith.addf %199, %207 : vector<4x1x8xf32>
    %cst_68 = arith.constant 0.000000e+00 : f32
    %209 = vector.broadcast %cst_68 : f32 to vector<4x1x8xf32>
    %210 = arith.subf %208, %209 : vector<4x1x8xf32>
    %211 = arith.subf %210, %167 : vector<4x1x8xf32>
    %cst_69 = arith.constant 12.8018274 : f32
    %212 = vector.broadcast %cst_69 : f32 to vector<4x1x8xf32>
    %213 = arith.subf %211, %212 : vector<4x1x8xf32>
    %214 = vector.broadcast %187 : vector<4x1x8xf32> to vector<4x10x8xf32>
    %215 = arith.subf %85, %214 : vector<4x10x8xf32>
    %216 = arith.mulf %159, %215 : vector<4x10x8xf32>
    %cst_70 = arith.constant dense<0.000000e+00> : vector<4x8xf32>
    %217 = vector.multi_reduction <add>, %216, %cst_70 [1] : vector<4x10x8xf32> to vector<4x8xf32>
    %218 = vector.shape_cast %217 : vector<4x8xf32> to vector<4x1x8xf32>
    %219 = arith.addf %213, %218 : vector<4x1x8xf32>
    %220 = vector.broadcast %0 : f32 to vector<4x1x8xf32>
    %221 = arith.mulf %220, %219 : vector<4x1x8xf32>
    %222 = arith.addf %155, %221 : vector<4x1x8xf32>
    %cst_71 = arith.constant dense<0.000000e+00> : vector<1x8xf32>
    %223 = vector.multi_reduction <add>, %222, %cst_71 [0] : vector<4x1x8xf32> to vector<1x8xf32>
    %cst_72 = arith.constant 2.500000e-01 : f32
    %224 = vector.broadcast %cst_72 : f32 to vector<1x8xf32>
    %225 = arith.mulf %223, %224 : vector<1x8xf32>
    %226 = vector.extract_strided_slice %27 {offsets = [0, 0, 0], sizes = [3, 10, 8], strides = [1, 1, 1]} : vector<4x10x8xf32> to vector<3x10x8xf32>
    %227 = vector.extract_strided_slice %29 {offsets = [0, 0, 0], sizes = [3, 1, 8], strides = [1, 1, 1]} : vector<4x1x8xf32> to vector<3x1x8xf32>
    %cst_73 = arith.constant 1.000000e+00 : f32
    %228 = vector.broadcast %cst_73 : f32 to vector<3x1x8xf32>
    %229 = arith.divf %228, %227 : vector<3x1x8xf32>
    %230 = vector.broadcast %229 : vector<3x1x8xf32> to vector<3x10x8xf32>
    %231 = arith.mulf %226, %230 : vector<3x10x8xf32>
    %cst_74 = arith.constant 1.000000e+01 : f32
    %232 = vector.broadcast %cst_74 : f32 to vector<3x1x8xf32>
    %233 = arith.mulf %232, %229 : vector<3x1x8xf32>
    %cst_75 = arith.constant 1.000000e+00 : f32
    %234 = vector.broadcast %cst_75 : f32 to vector<3x1x8xf32>
    %235 = arith.subf %234, %233 : vector<3x1x8xf32>
    %cst_76 = arith.constant 0.000000e+00 : f32
    %236 = vector.broadcast %cst_76 : f32 to vector<1x8xf32>
    %237 = vector.extract_strided_slice %231 {offsets = [0, 0, 0], sizes = [1, 10, 8], strides = [1, 1, 1]} : vector<3x10x8xf32> to vector<1x10x8xf32>
    %238 = vector.shape_cast %237 : vector<1x10x8xf32> to vector<10x8xf32>
    %239 = vector.shape_cast %238 : vector<10x8xf32> to vector<1x10x8xf32>
    %240 = vector.broadcast %239 : vector<1x10x8xf32> to vector<3x10x8xf32>
    %241 = arith.subf %231, %240 : vector<3x10x8xf32>
    %242 = math.absf %241 : vector<3x10x8xf32>
    %cst_77 = arith.constant dense<0.000000e+00> : vector<3x8xf32>
    %243 = vector.multi_reduction <add>, %242, %cst_77 [1] : vector<3x10x8xf32> to vector<3x8xf32>
    %244 = vector.shape_cast %243 : vector<3x8xf32> to vector<3x1x8xf32>
    %cst_78 = arith.constant 2.500000e-01 : f32
    %245 = vector.broadcast %cst_78 : f32 to vector<3x1x8xf32>
    %246 = arith.mulf %244, %245 : vector<3x1x8xf32>
    %247 = vector.extract_strided_slice %235 {offsets = [0, 0, 0], sizes = [1, 1, 8], strides = [1, 1, 1]} : vector<3x1x8xf32> to vector<1x1x8xf32>
    %248 = vector.shape_cast %247 : vector<1x1x8xf32> to vector<1x8xf32>
    %249 = vector.shape_cast %248 : vector<1x8xf32> to vector<1x1x8xf32>
    %250 = vector.broadcast %249 : vector<1x1x8xf32> to vector<3x1x8xf32>
    %251 = arith.mulf %235, %250 : vector<3x1x8xf32>
    %252 = arith.mulf %246, %251 : vector<3x1x8xf32>
    %cst_79 = arith.constant dense<0.000000e+00> : vector<1x8xf32>
    %253 = vector.multi_reduction <add>, %252, %cst_79 [0] : vector<3x1x8xf32> to vector<1x8xf32>
    %254 = arith.addf %236, %253 : vector<1x8xf32>
    %255 = vector.extract_strided_slice %231 {offsets = [1, 0, 0], sizes = [1, 10, 8], strides = [1, 1, 1]} : vector<3x10x8xf32> to vector<1x10x8xf32>
    %256 = vector.shape_cast %255 : vector<1x10x8xf32> to vector<10x8xf32>
    %257 = vector.shape_cast %256 : vector<10x8xf32> to vector<1x10x8xf32>
    %258 = vector.broadcast %257 : vector<1x10x8xf32> to vector<3x10x8xf32>
    %259 = arith.subf %231, %258 : vector<3x10x8xf32>
    %260 = math.absf %259 : vector<3x10x8xf32>
    %cst_80 = arith.constant dense<0.000000e+00> : vector<3x8xf32>
    %261 = vector.multi_reduction <add>, %260, %cst_80 [1] : vector<3x10x8xf32> to vector<3x8xf32>
    %262 = vector.shape_cast %261 : vector<3x8xf32> to vector<3x1x8xf32>
    %cst_81 = arith.constant 2.500000e-01 : f32
    %263 = vector.broadcast %cst_81 : f32 to vector<3x1x8xf32>
    %264 = arith.mulf %262, %263 : vector<3x1x8xf32>
    %265 = vector.extract_strided_slice %235 {offsets = [1, 0, 0], sizes = [1, 1, 8], strides = [1, 1, 1]} : vector<3x1x8xf32> to vector<1x1x8xf32>
    %266 = vector.shape_cast %265 : vector<1x1x8xf32> to vector<1x8xf32>
    %267 = vector.shape_cast %266 : vector<1x8xf32> to vector<1x1x8xf32>
    %268 = vector.broadcast %267 : vector<1x1x8xf32> to vector<3x1x8xf32>
    %269 = arith.mulf %235, %268 : vector<3x1x8xf32>
    %270 = arith.mulf %264, %269 : vector<3x1x8xf32>
    %cst_82 = arith.constant dense<0.000000e+00> : vector<1x8xf32>
    %271 = vector.multi_reduction <add>, %270, %cst_82 [0] : vector<3x1x8xf32> to vector<1x8xf32>
    %272 = arith.addf %254, %271 : vector<1x8xf32>
    %273 = vector.extract_strided_slice %231 {offsets = [2, 0, 0], sizes = [1, 10, 8], strides = [1, 1, 1]} : vector<3x10x8xf32> to vector<1x10x8xf32>
    %274 = vector.shape_cast %273 : vector<1x10x8xf32> to vector<10x8xf32>
    %275 = vector.shape_cast %274 : vector<10x8xf32> to vector<1x10x8xf32>
    %276 = vector.broadcast %275 : vector<1x10x8xf32> to vector<3x10x8xf32>
    %277 = arith.subf %231, %276 : vector<3x10x8xf32>
    %278 = math.absf %277 : vector<3x10x8xf32>
    %cst_83 = arith.constant dense<0.000000e+00> : vector<3x8xf32>
    %279 = vector.multi_reduction <add>, %278, %cst_83 [1] : vector<3x10x8xf32> to vector<3x8xf32>
    %280 = vector.shape_cast %279 : vector<3x8xf32> to vector<3x1x8xf32>
    %cst_84 = arith.constant 2.500000e-01 : f32
    %281 = vector.broadcast %cst_84 : f32 to vector<3x1x8xf32>
    %282 = arith.mulf %280, %281 : vector<3x1x8xf32>
    %283 = vector.extract_strided_slice %235 {offsets = [2, 0, 0], sizes = [1, 1, 8], strides = [1, 1, 1]} : vector<3x1x8xf32> to vector<1x1x8xf32>
    %284 = vector.shape_cast %283 : vector<1x1x8xf32> to vector<1x8xf32>
    %285 = vector.shape_cast %284 : vector<1x8xf32> to vector<1x1x8xf32>
    %286 = vector.broadcast %285 : vector<1x1x8xf32> to vector<3x1x8xf32>
    %287 = arith.mulf %235, %286 : vector<3x1x8xf32>
    %288 = arith.mulf %282, %287 : vector<3x1x8xf32>
    %cst_85 = arith.constant dense<0.000000e+00> : vector<1x8xf32>
    %289 = vector.multi_reduction <add>, %288, %cst_85 [0] : vector<3x1x8xf32> to vector<1x8xf32>
    %290 = arith.addf %272, %289 : vector<1x8xf32>
    %291 = vector.broadcast %1 : f32 to vector<1x8xf32>
    %292 = arith.mulf %291, %290 : vector<1x8xf32>
    %293 = arith.addf %225, %292 : vector<1x8xf32>
    %c0_86 = arith.constant 0 : index
    %c0_87 = arith.constant 0 : index
    %294 = vector.load %arg7[%c0_86, %c0_87] : memref<1x8xf32, #tpu.memory_space<vmem>>, vector<1x8xf32>
    tpu.vector_store %arg7[%c0_86, %c0_87], %293 {strides = array<i32>} : memref<1x8xf32, #tpu.memory_space<vmem>>, vector<1x8xf32>,
    return
  }
  func.func @transform_0(%arg0: i32) -> i32 {
    %c0_i32 = arith.constant 0 : i32
    %c0_i32_0 = arith.constant 0 : i32
    return %c0_i32 : i32
  }
  func.func @transform_1(%arg0: i32) -> (i32, i32) {
    %c0_i32 = arith.constant 0 : i32
    %c0_i32_0 = arith.constant 0 : i32
    return %c0_i32, %arg0 : i32, i32
  }
  func.func @transform_2(%arg0: i32) -> (i32, i32) {
    %c0_i32 = arith.constant 0 : i32
    %c0_i32_0 = arith.constant 0 : i32
    return %c0_i32, %arg0 : i32, i32
  }
  func.func @transform_3(%arg0: i32) -> (i32, i32) {
    %c0_i32 = arith.constant 0 : i32
    %c0_i32_0 = arith.constant 0 : i32
    return %c0_i32, %arg0 : i32, i32
  }
  func.func @transform_4(%arg0: i32) -> (i32, i32) {
    %c0_i32 = arith.constant 0 : i32
    %c0_i32_0 = arith.constant 0 : i32
    return %c0_i32, %arg0 : i32, i32
  }
  func.func @transform_5(%arg0: i32) -> (i32, i32) {
    %c0_i32 = arith.constant 0 : i32
    %c0_i32_0 = arith.constant 0 : i32
    return %c0_i32, %arg0 : i32, i32
  }
  func.func @transform_6(%arg0: i32) -> (i32, i32) {
    %c0_i32 = arith.constant 0 : i32
    %c0_i32_0 = arith.constant 0 : i32
    return %c0_i32, %arg0 : i32, i32
  }
}

</mosaic_0001>

<llo_original>
// kernel: tpu_custom_call.1
$region0: #{tpu_custom_call.1}
  #allocation0 [shape = 'u32[]', space=smem, size = 0x4, offset = 0x4, fixed_abs, tag = 'smem constant byte address 0x4 - core index']
  #allocation1 [shape = 'u32[144,128]{1,0:T(1,128)}', space=vmem, size = 0x12000, scoped, tag = 'internal scratch']
  %s0 = inlined_call_operand.vmem [shape: f32[2], index: 0, kind: input, shape index: {}]
  %s1 = inlined_call_operand.vmem [shape: s32[1,8], index: 1, kind: input, shape index: {}]
  %s2 = inlined_call_operand.vmem [shape: f32[10,8], index: 2, kind: input, shape index: {}]
  %s3 = inlined_call_operand.vmem [shape: f32[10,8], index: 3, kind: input, shape index: {}]
  %s4 = inlined_call_operand.vmem [shape: f32[10,8], index: 4, kind: input, shape index: {}]
  %s5 = inlined_call_operand.vmem [shape: f32[10,8], index: 5, kind: output, shape index: {0}]
  %s6 = inlined_call_operand.hbm [shape: f32[1,8], index: 6, kind: output, shape index: {1}]
  %7 = xla_tuple %s5, %s6
  %s8 = sld [smem:[#allocation0]]
  $region42: #{tpu_custom_call.1} parent=0
    _
  %s10 = ssub.s32 1, %s8
  %s11 = scalar_select 0, %s10, %s8
  $region1: #{tpu_custom_call.1} parent=0
    #allocation2 [shape = 'u8[512]{0}', space=smem, size = 0x200, scoped, tag = 'input window, operand 0, single buffered']
    #allocation3 [shape = 's32[1]{0}', space=sflag, size = 0x4, scoped, tag = 'scoped memory for tpu_custom_call.1']
    #allocation4 [shape = 's32[1]{0}', space=sflag, size = 0x4, scoped, tag = 'scoped memory for tpu_custom_call.1']
    #allocation5 [shape = 'u8[512]{0}', space=vmem, size = 0x400, scoped, tag = 'output window, operand 1, single buffered']
    %12 = vsyncpa [#allocation4], 0
    %13 = vsyncpa [#allocation3], 0
    // Predicated region
    $region2: #{tpu_custom_call.1} parent=1 // pred_check
      _
    $region3: #{tpu_custom_call.1} parent=1 // pred_check_branch
      %15 = sbr.rel (0) target = $region5
    $region4: #{tpu_custom_call.1} parent=1 // pred_region
      %s17 = ssub.s32 16, 16
      %18 = vsyncadd [#allocation4], %s17
      %s20 = sshll.u32 %s0, 4
      %s21 = int_to_ptr.vmem [resolvable:$true] %s20
      %23 = dma.vmem_to_smem %s21, 16, [#allocation2], [#allocation4]
    $region5: #{tpu_custom_call.1} parent=1 // pred_fallthru
      _
    // Predicated region
    $region6: #{tpu_custom_call.1} parent=1 // pred_check
      _
    $region7: #{tpu_custom_call.1} parent=1 // pred_check_branch
      %25 = sbr.rel (0) target = $region9
    $region8: #{tpu_custom_call.1} parent=1 // pred_region
      _
    $region9: #{tpu_custom_call.1} parent=1 // pred_fallthru
      _
    // Predicated region
    $region10: #{tpu_custom_call.1} parent=1 // pred_check
      _
    $region11: #{tpu_custom_call.1} parent=1 // pred_check_branch
      %27 = sbr.rel (0) target = $region13
    $region12: #{tpu_custom_call.1} parent=1 // pred_region
      _
    $region13: #{tpu_custom_call.1} parent=1 // pred_fallthru
      _
    // Predicated region
    $region14: #{tpu_custom_call.1} parent=1 // pred_check
      _
    $region15: #{tpu_custom_call.1} parent=1 // pred_check_branch
      %29 = sbr.rel (0) target = $region17
    $region16: #{tpu_custom_call.1} parent=1 // pred_region
      _
    $region17: #{tpu_custom_call.1} parent=1 // pred_fallthru
      _
    // Predicated region
    $region18: #{tpu_custom_call.1} parent=1 // pred_check
      _
    $region19: #{tpu_custom_call.1} parent=1 // pred_check_branch
      %31 = sbr.rel (0) target = $region21
    $region20: #{tpu_custom_call.1} parent=1 // pred_region
      _
    $region21: #{tpu_custom_call.1} parent=1 // pred_fallthru
      _
    // Predicated region
    $region22: #{tpu_custom_call.1} parent=1 // pred_check
      _
    $region23: #{tpu_custom_call.1} parent=1 // pred_check_branch
      %33 = sbr.rel (0) target = $region25
    $region24: #{tpu_custom_call.1} parent=1 // pred_region
      %34 = dma.done [#allocation4], 16
    $region25: #{tpu_custom_call.1} parent=1 // pred_fallthru
      _
    %35 = sfence
    %s36 = sld [smem:[#allocation2]]
    %s37 = sld [smem:[#allocation2 + $0x1]]
    %v38 = vld [vmem:[%s2] sm:$0xff]
    %v39 = vld [vmem:[%s2 + $0x8] sm:$0x3]
    %v40 = vld [vmem:[%s3] sm:$0xff]
    %v41 = vld [vmem:[%s3 + $0x8] sm:$0x3]
    %v42 = vld [vmem:[%s4] sm:$0xff]
    %v43 = vld [vmem:[%s4 + $0x8] sm:$0x3]
    %v44 = vadd.f32 %v40, %v38
    %v45 = vadd.f32 %v41, %v39
    %v46 = vmul.f32 %v44, 0.5
    %v47 = vmul.f32 %v45, 0.5
    %v48 = vadd.f32 %v42, %v46
    %v49 = vadd.f32 %v43, %v47
    %v50 = vmul.f32 %v48, 0.5
    %v51 = vmul.f32 %v49, 0.5
    %vm52 = vcmask 64512
    %53 = vst.msk [vmem:[%s5] sm:$0xff] %vm52, %v50
    %vm54 = vcmask 58368
    %55 = vst.msk [vmem:[%s5 + $0x8] sm:$0x3] %vm54, %v51
    %v56 = vlaneseq
    %v57 = vshrl.u32 %v56, 7
    %v58 = vadd.s32 %v57, 8
    %v59 = vld [vmem:[%s1] sm:$0x1]
    %v60 = vlaneseq
    %v61 = vshrl.u32 %v60, 7
    %v62 = vsub.s32 0, %v61
    %v63 = vrot.slane %v59, %v62
    %vm64 = vcmp.eq.s32.totalorder %v57, %v63
    %vm65 = vcmp.eq.s32.totalorder %v58, %v63
    %v66 = vsel %vm64, 1, 0
    %v67 = vsel %vm65, 1, 0
    %v68 = vcvt.s32.f32 %v66
    %v69 = vcvt.s32.f32 %v67
    %v70 = vsub.f32 1.0, %v68
    %v71 = vsub.f32 1.0, %v69
    %v72 = vadd.f32 %v38, 1.0
    %v73 = vadd.f32 %v39, 1.0
    %v74 = vadd.f32 %v40, 1.0
    %v75 = vadd.f32 %v41, 1.0
    %v76 = vadd.f32 %v42, 1.0
    %v77 = vadd.f32 %v43, 1.0
    %v78 = vadd.f32 %v50, 1.0
    %v79 = vadd.f32 %v51, 1.0
    %v80 = vsel %vm52, %v72, 0.0
    %v81 = vsel %vm54, %v73, 0.0
    %v82 = vadd.f32 %v80, %v81
    %v83 = vrot.slane %v82, 4
    %v84 = vadd.f32 %v82, %v83
    %v85 = vrot.slane %v84, 2
    %v86 = vadd.f32 %v84, %v85
    %v87 = vrot.slane %v86, 1
    %v88 = vadd.f32 %v86, %v87
    %v89 = vsel %vm52, %v74, 0.0
    %v90 = vsel %vm54, %v75, 0.0
    %v91 = vadd.f32 %v89, %v90
    %v92 = vrot.slane %v91, 4
    %v93 = vadd.f32 %v91, %v92
    %v94 = vrot.slane %v93, 2
    %v95 = vadd.f32 %v93, %v94
    %v96 = vrot.slane %v95, 1
    %v97 = vadd.f32 %v95, %v96
    %v98 = vsel %vm52, %v76, 0.0
    %v99 = vsel %vm54, %v77, 0.0
    %v100 = vadd.f32 %v98, %v99
    %v101 = vrot.slane %v100, 4
    %v102 = vadd.f32 %v100, %v101
    %v103 = vrot.slane %v102, 2
    %v104 = vadd.f32 %v102, %v103
    %v105 = vrot.slane %v104, 1
    %v106 = vadd.f32 %v104, %v105
    %v107 = vsel %vm52, %v78, 0.0
    %v108 = vsel %vm54, %v79, 0.0
    %v109 = vadd.f32 %v107, %v108
    %v110 = vrot.slane %v109, 4
    %v111 = vadd.f32 %v109, %v110
    %v112 = vrot.slane %v111, 2
    %v113 = vadd.f32 %v111, %v112
    %v114 = vrot.slane %v113, 1
    %v115 = vadd.f32 %v113, %v114
    %v116 = vadd.f32 %v72, 8.0
    %v117 = vadd.f32 %v73, 8.0
    %v118 = vadd.f32 %v74, 8.0
    %v119 = vadd.f32 %v75, 8.0
    %v120 = vadd.f32 %v76, 8.0
    %v121 = vadd.f32 %v77, 8.0
    %v122 = vadd.f32 %v78, 8.0
    %v123 = vadd.f32 %v79, 8.0
    %v124 = vadd.f32 %v72, 1.0
    %v125 = vadd.f32 %v73, 1.0
    %v126 = vadd.f32 %v74, 1.0
    %v127 = vadd.f32 %v75, 1.0
    %v128 = vadd.f32 %v76, 1.0
    %v129 = vadd.f32 %v77, 1.0
    %v130 = vadd.f32 %v78, 1.0
    %v131 = vadd.f32 %v79, 1.0
    %v132 = vadd.f32 %v124, %v72
    %v133 = vadd.f32 %v125, %v73
    %v134 = vadd.f32 %v126, %v74
    %v135 = vadd.f32 %v127, %v75
    %v136 = vadd.f32 %v128, %v76
    %v137 = vadd.f32 %v129, %v77
    %v138 = vadd.f32 %v130, %v78
    %v139 = vadd.f32 %v131, %v79
    %v140 = vmul.f32 %v72, %v124
    %v141 = vmul.f32 %v73, %v125
    %v142 = vmul.f32 %v74, %v126
    %v143 = vmul.f32 %v75, %v127
    %v144 = vmul.f32 %v76, %v128
    %v145 = vmul.f32 %v77, %v129
    %v146 = vmul.f32 %v78, %v130
    %v147 = vmul.f32 %v79, %v131
    %v148 = vadd.f32 %v124, 1.0
    %v149 = vadd.f32 %v125, 1.0
    %v150 = vadd.f32 %v126, 1.0
    %v151 = vadd.f32 %v127, 1.0
    %v152 = vadd.f32 %v128, 1.0
    %v153 = vadd.f32 %v129, 1.0
    %v154 = vadd.f32 %v130, 1.0
    %v155 = vadd.f32 %v131, 1.0
    %v156 = vmul.f32 %v132, %v148
    %v157 = vmul.f32 %v133, %v149
    %v158 = vmul.f32 %v134, %v150
    %v159 = vmul.f32 %v135, %v151
    %v160 = vmul.f32 %v136, %v152
    %v161 = vmul.f32 %v137, %v153
    %v162 = vmul.f32 %v138, %v154
    %v163 = vmul.f32 %v139, %v155
    %v164 = vadd.f32 %v156, %v140
    %v165 = vadd.f32 %v157, %v141
    %v166 = vadd.f32 %v158, %v142
    %v167 = vadd.f32 %v159, %v143
    %v168 = vadd.f32 %v160, %v144
    %v169 = vadd.f32 %v161, %v145
    %v170 = vadd.f32 %v162, %v146
    %v171 = vadd.f32 %v163, %v147
    %v172 = vmul.f32 %v140, %v148
    %v173 = vmul.f32 %v141, %v149
    %v174 = vmul.f32 %v142, %v150
    %v175 = vmul.f32 %v143, %v151
    %v176 = vmul.f32 %v144, %v152
    %v177 = vmul.f32 %v145, %v153
    %v178 = vmul.f32 %v146, %v154
    %v179 = vmul.f32 %v147, %v155
    %v180 = vadd.f32 %v148, 1.0
    %v181 = vadd.f32 %v149, 1.0
    %v182 = vadd.f32 %v150, 1.0
    %v183 = vadd.f32 %v151, 1.0
    %v184 = vadd.f32 %v152, 1.0
    %v185 = vadd.f32 %v153, 1.0
    %v186 = vadd.f32 %v154, 1.0
    %v187 = vadd.f32 %v155, 1.0
    %v188 = vmul.f32 %v164, %v180
    %v189 = vmul.f32 %v165, %v181
    %v190 = vmul.f32 %v166, %v182
    %v191 = vmul.f32 %v167, %v183
    %v192 = vmul.f32 %v168, %v184
    %v193 = vmul.f32 %v169, %v185
    %v194 = vmul.f32 %v170, %v186
    %v195 = vmul.f32 %v171, %v187
    %v196 = vadd.f32 %v188, %v172
    %v197 = vadd.f32 %v189, %v173
    %v198 = vadd.f32 %v190, %v174
    %v199 = vadd.f32 %v191, %v175
    %v200 = vadd.f32 %v192, %v176
    %v201 = vadd.f32 %v193, %v177
    %v202 = vadd.f32 %v194, %v178
    %v203 = vadd.f32 %v195, %v179
    %v204 = vmul.f32 %v172, %v180
    %v205 = vmul.f32 %v173, %v181
    %v206 = vmul.f32 %v174, %v182
    %v207 = vmul.f32 %v175, %v183
    %v208 = vmul.f32 %v176, %v184
    %v209 = vmul.f32 %v177, %v185
    %v210 = vmul.f32 %v178, %v186
    %v211 = vmul.f32 %v179, %v187
    %v212 = vadd.f32 %v180, 1.0
    %v213 = vadd.f32 %v181, 1.0
    %v214 = vadd.f32 %v182, 1.0
    %v215 = vadd.f32 %v183, 1.0
    %v216 = vadd.f32 %v184, 1.0
    %v217 = vadd.f32 %v185, 1.0
    %v218 = vadd.f32 %v186, 1.0
    %v219 = vadd.f32 %v187, 1.0
    %v220 = vmul.f32 %v196, %v212
    %v221 = vmul.f32 %v197, %v213
    %v222 = vmul.f32 %v198, %v214
    %v223 = vmul.f32 %v199, %v215
    %v224 = vmul.f32 %v200, %v216
    %v225 = vmul.f32 %v201, %v217
    %v226 = vmul.f32 %v202, %v218
    %v227 = vmul.f32 %v203, %v219
    %v228 = vadd.f32 %v220, %v204
    %v229 = vadd.f32 %v221, %v205
    %v230 = vadd.f32 %v222, %v206
    %v231 = vadd.f32 %v223, %v207
    %v232 = vadd.f32 %v224, %v208
    %v233 = vadd.f32 %v225, %v209
    %v234 = vadd.f32 %v226, %v210
    %v235 = vadd.f32 %v227, %v211
    %v236 = vmul.f32 %v204, %v212
    %v237 = vmul.f32 %v205, %v213
    %v238 = vmul.f32 %v206, %v214
    %v239 = vmul.f32 %v207, %v215
    %v240 = vmul.f32 %v208, %v216
    %v241 = vmul.f32 %v209, %v217
    %v242 = vmul.f32 %v210, %v218
    %v243 = vmul.f32 %v211, %v219
    %v244 = vadd.f32 %v212, 1.0
    %v245 = vadd.f32 %v213, 1.0
    %v246 = vadd.f32 %v214, 1.0
    %v247 = vadd.f32 %v215, 1.0
    %v248 = vadd.f32 %v216, 1.0
    %v249 = vadd.f32 %v217, 1.0
    %v250 = vadd.f32 %v218, 1.0
    %v251 = vadd.f32 %v219, 1.0
    %v252 = vmul.f32 %v228, %v244
    %v253 = vmul.f32 %v229, %v245
    %v254 = vmul.f32 %v230, %v246
    %v255 = vmul.f32 %v231, %v247
    %v256 = vmul.f32 %v232, %v248
    %v257 = vmul.f32 %v233, %v249
    %v258 = vmul.f32 %v234, %v250
    %v259 = vmul.f32 %v235, %v251
    %v260 = vadd.f32 %v252, %v236
    %v261 = vadd.f32 %v253, %v237
    %v262 = vadd.f32 %v254, %v238
    %v263 = vadd.f32 %v255, %v239
    %v264 = vadd.f32 %v256, %v240
    %v265 = vadd.f32 %v257, %v241
    %v266 = vadd.f32 %v258, %v242
    %v267 = vadd.f32 %v259, %v243
    %v268 = vmul.f32 %v236, %v244
    %v269 = vmul.f32 %v237, %v245
    %v270 = vmul.f32 %v238, %v246
    %v271 = vmul.f32 %v239, %v247
    %v272 = vmul.f32 %v240, %v248
    %v273 = vmul.f32 %v241, %v249
    %v274 = vmul.f32 %v242, %v250
    %v275 = vmul.f32 %v243, %v251
    %v276 = vadd.f32 %v244, 1.0
    %v277 = vadd.f32 %v245, 1.0
    %v278 = vadd.f32 %v246, 1.0
    %v279 = vadd.f32 %v247, 1.0
    %v280 = vadd.f32 %v248, 1.0
    %v281 = vadd.f32 %v249, 1.0
    %v282 = vadd.f32 %v250, 1.0
    %v283 = vadd.f32 %v251, 1.0
    %v284 = vmul.f32 %v260, %v276
    %v285 = vmul.f32 %v261, %v277
    %v286 = vmul.f32 %v262, %v278
    %v287 = vmul.f32 %v263, %v279
    %v288 = vmul.f32 %v264, %v280
    %v289 = vmul.f32 %v265, %v281
    %v290 = vmul.f32 %v266, %v282
    %v291 = vmul.f32 %v267, %v283
    %v292 = vadd.f32 %v284, %v268
    %v293 = vadd.f32 %v285, %v269
    %v294 = vadd.f32 %v286, %v270
    %v295 = vadd.f32 %v287, %v271
    %v296 = vadd.f32 %v288, %v272
    %v297 = vadd.f32 %v289, %v273
    %v298 = vadd.f32 %v290, %v274
    %v299 = vadd.f32 %v291, %v275
    %v300 = vmul.f32 %v268, %v276
    %v301 = vmul.f32 %v269, %v277
    %v302 = vmul.f32 %v270, %v278
    %v303 = vmul.f32 %v271, %v279
    %v304 = vmul.f32 %v272, %v280
    %v305 = vmul.f32 %v273, %v281
    %v306 = vmul.f32 %v274, %v282
    %v307 = vmul.f32 %v275, %v283
    %v308 = vadd.f32 %v276, 1.0
    %v309 = vadd.f32 %v277, 1.0
    %v310 = vadd.f32 %v278, 1.0
    %v311 = vadd.f32 %v279, 1.0
    %v312 = vadd.f32 %v280, 1.0
    %v313 = vadd.f32 %v281, 1.0
    %v314 = vadd.f32 %v282, 1.0
    %v315 = vadd.f32 %v283, 1.0
    %v316 = vmul.f32 %v292, %v308
    %v317 = vmul.f32 %v293, %v309
    %v318 = vmul.f32 %v294, %v310
    %v319 = vmul.f32 %v295, %v311
    %v320 = vmul.f32 %v296, %v312
    %v321 = vmul.f32 %v297, %v313
    %v322 = vmul.f32 %v298, %v314
    %v323 = vmul.f32 %v299, %v315
    %v324 = vadd.f32 %v316, %v300
    %v325 = vadd.f32 %v317, %v301
    %v326 = vadd.f32 %v318, %v302
    %v327 = vadd.f32 %v319, %v303
    %v328 = vadd.f32 %v320, %v304
    %v329 = vadd.f32 %v321, %v305
    %v330 = vadd.f32 %v322, %v306
    %v331 = vadd.f32 %v323, %v307
    %v332 = vmul.f32 %v300, %v308
    %v333 = vmul.f32 %v301, %v309
    %v334 = vmul.f32 %v302, %v310
    %v335 = vmul.f32 %v303, %v311
    %v336 = vmul.f32 %v304, %v312
    %v337 = vmul.f32 %v305, %v313
    %v338 = vmul.f32 %v306, %v314
    %v339 = vmul.f32 %v307, %v315
    %v340 = vrcp.pop %v332
    %v341 = vmul.f32 %v324, %v340
    %v342 = vrcp.pop %v333
    %v343 = vmul.f32 %v325, %v342
    %v344 = vrcp.pop %v334
    %v345 = vmul.f32 %v326, %v344
    %v346 = vrcp.pop %v335
    %v347 = vmul.f32 %v327, %v346
    %v348 = vrcp.pop %v336
    %v349 = vmul.f32 %v328, %v348
    %v350 = vrcp.pop %v337
    %v351 = vmul.f32 %v329, %v350
    %v352 = vrcp.pop %v338
    %v353 = vmul.f32 %v330, %v352
    %v354 = vrcp.pop %v339
    %v355 = vmul.f32 %v331, %v354
    %v356 = vrcp.pop %v116
    %v357 = vmul.f32 1.0, %v356
    %v358 = vrcp.pop %v117
    %v359 = vmul.f32 1.0, %v358
    %v360 = vrcp.pop %v118
    %v361 = vmul.f32 1.0, %v360
    %v362 = vrcp.pop %v119
    %v363 = vmul.f32 1.0, %v362
    %v364 = vrcp.pop %v120
    %v365 = vmul.f32 1.0, %v364
    %v366 = vrcp.pop %v121
    %v367 = vmul.f32 1.0, %v366
    %v368 = vrcp.pop %v122
    %v369 = vmul.f32 1.0, %v368
    %v370 = vrcp.pop %v123
    %v371 = vmul.f32 1.0, %v370
    %v372 = vmul.f32 %v357, %v357
    %v373 = vmul.f32 %v359, %v359
    %v374 = vmul.f32 %v361, %v361
    %v375 = vmul.f32 %v363, %v363
    %v376 = vmul.f32 %v365, %v365
    %v377 = vmul.f32 %v367, %v367
    %v378 = vmul.f32 %v369, %v369
    %v379 = vmul.f32 %v371, %v371
    %v380 = vlog2.pop %v116
    %v381 = vmul.f32 %v380, 0.6931472
    %v382 = vlog2.pop %v117
    %v383 = vmul.f32 %v382, 0.6931472
    %v384 = vlog2.pop %v118
    %v385 = vmul.f32 %v384, 0.6931472
    %v386 = vlog2.pop %v119
    %v387 = vmul.f32 %v386, 0.6931472
    %v388 = vlog2.pop %v120
    %v389 = vmul.f32 %v388, 0.6931472
    %v390 = vlog2.pop %v121
    %v391 = vmul.f32 %v390, 0.6931472
    %v392 = vlog2.pop %v122
    %v393 = vmul.f32 %v392, 0.6931472
    %v394 = vlog2.pop %v123
    %v395 = vmul.f32 %v394, 0.6931472
    %v396 = vmul.f32 %v357, 0.5
    %v397 = vmul.f32 %v359, 0.5
    %v398 = vmul.f32 %v361, 0.5
    %v399 = vmul.f32 %v363, 0.5
    %v400 = vmul.f32 %v365, 0.5
    %v401 = vmul.f32 %v367, 0.5
    %v402 = vmul.f32 %v369, 0.5
    %v403 = vmul.f32 %v371, 0.5
    %v404 = vsub.f32 %v381, %v396
    %v405 = vsub.f32 %v383, %v397
    %v406 = vsub.f32 %v385, %v398
    %v407 = vsub.f32 %v387, %v399
    %v408 = vsub.f32 %v389, %v400
    %v409 = vsub.f32 %v391, %v401
    %v410 = vsub.f32 %v393, %v402
    %v411 = vsub.f32 %v395, %v403
    %v412 = vmul.f32 %v372, 0.003968254
    %v413 = vmul.f32 %v373, 0.003968254
    %v414 = vmul.f32 %v374, 0.003968254
    %v415 = vmul.f32 %v375, 0.003968254
    %v416 = vmul.f32 %v376, 0.003968254
    %v417 = vmul.f32 %v377, 0.003968254
    %v418 = vmul.f32 %v378, 0.003968254
    %v419 = vmul.f32 %v379, 0.003968254
    %v420 = vsub.f32 0.008333334, %v412
    %v421 = vsub.f32 0.008333334, %v413
    %v422 = vsub.f32 0.008333334, %v414
    %v423 = vsub.f32 0.008333334, %v415
    %v424 = vsub.f32 0.008333334, %v416
    %v425 = vsub.f32 0.008333334, %v417
    %v426 = vsub.f32 0.008333334, %v418
    %v427 = vsub.f32 0.008333334, %v419
    %v428 = vmul.f32 %v372, %v420
    %v429 = vmul.f32 %v373, %v421
    %v430 = vmul.f32 %v374, %v422
    %v431 = vmul.f32 %v375, %v423
    %v432 = vmul.f32 %v376, %v424
    %v433 = vmul.f32 %v377, %v425
    %v434 = vmul.f32 %v378, %v426
    %v435 = vmul.f32 %v379, %v427
    %v436 = vsub.f32 0.083333336, %v428
    %v437 = vsub.f32 0.083333336, %v429
    %v438 = vsub.f32 0.083333336, %v430
    %v439 = vsub.f32 0.083333336, %v431
    %v440 = vsub.f32 0.083333336, %v432
    %v441 = vsub.f32 0.083333336, %v433
    %v442 = vsub.f32 0.083333336, %v434
    %v443 = vsub.f32 0.083333336, %v435
    %v444 = vmul.f32 %v372, %v436
    %v445 = vmul.f32 %v373, %v437
    %v446 = vmul.f32 %v374, %v438
    %v447 = vmul.f32 %v375, %v439
    %v448 = vmul.f32 %v376, %v440
    %v449 = vmul.f32 %v377, %v441
    %v450 = vmul.f32 %v378, %v442
    %v451 = vmul.f32 %v379, %v443
    %v452 = vsub.f32 %v404, %v444
    %v453 = vsub.f32 %v405, %v445
    %v454 = vsub.f32 %v406, %v446
    %v455 = vsub.f32 %v407, %v447
    %v456 = vsub.f32 %v408, %v448
    %v457 = vsub.f32 %v409, %v449
    %v458 = vsub.f32 %v410, %v450
    %v459 = vsub.f32 %v411, %v451
    %v460 = vsub.f32 %v452, %v341
    %v461 = vsub.f32 %v453, %v343
    %v462 = vsub.f32 %v454, %v345
    %v463 = vsub.f32 %v455, %v347
    %v464 = vsub.f32 %v456, %v349
    %v465 = vsub.f32 %v457, %v351
    %v466 = vsub.f32 %v458, %v353
    %v467 = vsub.f32 %v459, %v355
    %v468 = vlog2.pop %v332
    %v469 = vmul.f32 %v468, 0.6931472
    %v470 = vlog2.pop %v333
    %v471 = vmul.f32 %v470, 0.6931472
    %v472 = vlog2.pop %v334
    %v473 = vmul.f32 %v472, 0.6931472
    %v474 = vlog2.pop %v335
    %v475 = vmul.f32 %v474, 0.6931472
    %v476 = vlog2.pop %v336
    %v477 = vmul.f32 %v476, 0.6931472
    %v478 = vlog2.pop %v337
    %v479 = vmul.f32 %v478, 0.6931472
    %v480 = vlog2.pop %v338
    %v481 = vmul.f32 %v480, 0.6931472
    %v482 = vlog2.pop %v339
    %v483 = vmul.f32 %v482, 0.6931472
    %v484 = vsub.f32 %v116, 0.5
    %v485 = vsub.f32 %v117, 0.5
    %v486 = vsub.f32 %v118, 0.5
    %v487 = vsub.f32 %v119, 0.5
    %v488 = vsub.f32 %v120, 0.5
    %v489 = vsub.f32 %v121, 0.5
    %v490 = vsub.f32 %v122, 0.5
    %v491 = vsub.f32 %v123, 0.5
    %v492 = vmul.f32 %v484, %v381
    %v493 = vmul.f32 %v485, %v383
    %v494 = vmul.f32 %v486, %v385
    %v495 = vmul.f32 %v487, %v387
    %v496 = vmul.f32 %v488, %v389
    %v497 = vmul.f32 %v489, %v391
    %v498 = vmul.f32 %v490, %v393
    %v499 = vmul.f32 %v491, %v395
    %v500 = vsub.f32 %v492, %v116
    %v501 = vsub.f32 %v493, %v117
    %v502 = vsub.f32 %v494, %v118
    %v503 = vsub.f32 %v495, %v119
    %v504 = vsub.f32 %v496, %v120
    %v505 = vsub.f32 %v497, %v121
    %v506 = vsub.f32 %v498, %v122
    %v507 = vsub.f32 %v499, %v123
    %v508 = vadd.f32 %v500, 0.9189385
    %v509 = vadd.f32 %v501, 0.9189385
    %v510 = vadd.f32 %v502, 0.9189385
    %v511 = vadd.f32 %v503, 0.9189385
    %v512 = vadd.f32 %v504, 0.9189385
    %v513 = vadd.f32 %v505, 0.9189385
    %v514 = vadd.f32 %v506, 0.9189385
    %v515 = vadd.f32 %v507, 0.9189385
    %v516 = vmul.f32 %v372, 0.0007936508
    %v517 = vmul.f32 %v373, 0.0007936508
    %v518 = vmul.f32 %v374, 0.0007936508
    %v519 = vmul.f32 %v375, 0.0007936508
    %v520 = vmul.f32 %v376, 0.0007936508
    %v521 = vmul.f32 %v377, 0.0007936508
    %v522 = vmul.f32 %v378, 0.0007936508
    %v523 = vmul.f32 %v379, 0.0007936508
    %v524 = vsub.f32 0.0027777778, %v516
    %v525 = vsub.f32 0.0027777778, %v517
    %v526 = vsub.f32 0.0027777778, %v518
    %v527 = vsub.f32 0.0027777778, %v519
    %v528 = vsub.f32 0.0027777778, %v520
    %v529 = vsub.f32 0.0027777778, %v521
    %v530 = vsub.f32 0.0027777778, %v522
    %v531 = vsub.f32 0.0027777778, %v523
    %v532 = vmul.f32 %v372, %v524
    %v533 = vmul.f32 %v373, %v525
    %v534 = vmul.f32 %v374, %v526
    %v535 = vmul.f32 %v375, %v527
    %v536 = vmul.f32 %v376, %v528
    %v537 = vmul.f32 %v377, %v529
    %v538 = vmul.f32 %v378, %v530
    %v539 = vmul.f32 %v379, %v531
    %v540 = vsub.f32 0.083333336, %v532
    %v541 = vsub.f32 0.083333336, %v533
    %v542 = vsub.f32 0.083333336, %v534
    %v543 = vsub.f32 0.083333336, %v535
    %v544 = vsub.f32 0.083333336, %v536
    %v545 = vsub.f32 0.083333336, %v537
    %v546 = vsub.f32 0.083333336, %v538
    %v547 = vsub.f32 0.083333336, %v539
    %v548 = vmul.f32 %v357, %v540
    %v549 = vmul.f32 %v359, %v541
    %v550 = vmul.f32 %v361, %v542
    %v551 = vmul.f32 %v363, %v543
    %v552 = vmul.f32 %v365, %v544
    %v553 = vmul.f32 %v367, %v545
    %v554 = vmul.f32 %v369, %v546
    %v555 = vmul.f32 %v371, %v547
    %v556 = vadd.f32 %v508, %v548
    %v557 = vadd.f32 %v509, %v549
    %v558 = vadd.f32 %v510, %v550
    %v559 = vadd.f32 %v511, %v551
    %v560 = vadd.f32 %v512, %v552
    %v561 = vadd.f32 %v513, %v553
    %v562 = vadd.f32 %v514, %v554
    %v563 = vadd.f32 %v515, %v555
    %v564 = vsub.f32 %v556, %v469
    %v565 = vsub.f32 %v557, %v471
    %v566 = vsub.f32 %v558, %v473
    %v567 = vsub.f32 %v559, %v475
    %v568 = vsub.f32 %v560, %v477
    %v569 = vsub.f32 %v561, %v479
    %v570 = vsub.f32 %v562, %v481
    %v571 = vsub.f32 %v563, %v483
    %v572 = vadd.f32 %v88, 0.0
    %v573 = vadd.f32 %v97, 0.0
    %v574 = vadd.f32 %v106, 0.0
    %v575 = vadd.f32 %v115, 0.0
    %v576 = vrcp.pop %v572
    %v577 = vmul.f32 1.0, %v576
    %v578 = vrcp.pop %v573
    %v579 = vmul.f32 1.0, %v578
    %v580 = vrcp.pop %v574
    %v581 = vmul.f32 1.0, %v580
    %v582 = vrcp.pop %v575
    %v583 = vmul.f32 1.0, %v582
    %v584 = vmul.f32 %v577, %v577
    %v585 = vmul.f32 %v579, %v579
    %v586 = vmul.f32 %v581, %v581
    %v587 = vmul.f32 %v583, %v583
    %v588 = vlog2.pop %v572
    %v589 = vmul.f32 %v588, 0.6931472
    %v590 = vlog2.pop %v573
    %v591 = vmul.f32 %v590, 0.6931472
    %v592 = vlog2.pop %v574
    %v593 = vmul.f32 %v592, 0.6931472
    %v594 = vlog2.pop %v575
    %v595 = vmul.f32 %v594, 0.6931472
    %v596 = vmul.f32 %v577, 0.5
    %v597 = vmul.f32 %v579, 0.5
    %v598 = vmul.f32 %v581, 0.5
    %v599 = vmul.f32 %v583, 0.5
    %v600 = vsub.f32 %v589, %v596
    %v601 = vsub.f32 %v591, %v597
    %v602 = vsub.f32 %v593, %v598
    %v603 = vsub.f32 %v595, %v599
    %v604 = vmul.f32 %v584, 0.003968254
    %v605 = vmul.f32 %v585, 0.003968254
    %v606 = vmul.f32 %v586, 0.003968254
    %v607 = vmul.f32 %v587, 0.003968254
    %v608 = vsub.f32 0.008333334, %v604
    %v609 = vsub.f32 0.008333334, %v605
    %v610 = vsub.f32 0.008333334, %v606
    %v611 = vsub.f32 0.008333334, %v607
    %v612 = vmul.f32 %v584, %v608
    %v613 = vmul.f32 %v585, %v609
    %v614 = vmul.f32 %v586, %v610
    %v615 = vmul.f32 %v587, %v611
    %v616 = vsub.f32 0.083333336, %v612
    %v617 = vsub.f32 0.083333336, %v613
    %v618 = vsub.f32 0.083333336, %v614
    %v619 = vsub.f32 0.083333336, %v615
    %v620 = vmul.f32 %v584, %v616
    %v621 = vmul.f32 %v585, %v617
    %v622 = vmul.f32 %v586, %v618
    %v623 = vmul.f32 %v587, %v619
    %v624 = vsub.f32 %v600, %v620
    %v625 = vsub.f32 %v601, %v621
    %v626 = vsub.f32 %v602, %v622
    %v627 = vsub.f32 %v603, %v623
    %v628 = vsub.f32 %v624, %v460
    %v629 = vsub.f32 %v624, %v461
    %v630 = vsub.f32 %v625, %v462
    %v631 = vsub.f32 %v625, %v463
    %v632 = vsub.f32 %v626, %v464
    %v633 = vsub.f32 %v626, %v465
    %v634 = vsub.f32 %v627, %v466
    %v635 = vsub.f32 %v627, %v467
    %v636 = vmul.f32 %v68, %v628
    %v637 = vmul.f32 %v69, %v629
    %v638 = vmul.f32 %v68, %v630
    %v639 = vmul.f32 %v69, %v631
    %v640 = vmul.f32 %v68, %v632
    %v641 = vmul.f32 %v69, %v633
    %v642 = vmul.f32 %v68, %v634
    %v643 = vmul.f32 %v69, %v635
    %v644 = vsel %vm52, %v636, 0.0
    %v645 = vsel %vm54, %v637, 0.0
    %v646 = vadd.f32 %v644, %v645
    %v647 = vrot.slane %v646, 4
    %v648 = vadd.f32 %v646, %v647
    %v649 = vrot.slane %v648, 2
    %v650 = vadd.f32 %v648, %v649
    %v651 = vrot.slane %v650, 1
    %v652 = vadd.f32 %v650, %v651
    %v653 = vsel %vm52, %v638, 0.0
    %v654 = vsel %vm54, %v639, 0.0
    %v655 = vadd.f32 %v653, %v654
    %v656 = vrot.slane %v655, 4
    %v657 = vadd.f32 %v655, %v656
    %v658 = vrot.slane %v657, 2
    %v659 = vadd.f32 %v657, %v658
    %v660 = vrot.slane %v659, 1
    %v661 = vadd.f32 %v659, %v660
    %v662 = vsel %vm52, %v640, 0.0
    %v663 = vsel %vm54, %v641, 0.0
    %v664 = vadd.f32 %v662, %v663
    %v665 = vrot.slane %v664, 4
    %v666 = vadd.f32 %v664, %v665
    %v667 = vrot.slane %v666, 2
    %v668 = vadd.f32 %v666, %v667
    %v669 = vrot.slane %v668, 1
    %v670 = vadd.f32 %v668, %v669
    %v671 = vsel %vm52, %v642, 0.0
    %v672 = vsel %vm54, %v643, 0.0
    %v673 = vadd.f32 %v671, %v672
    %v674 = vrot.slane %v673, 4
    %v675 = vadd.f32 %v673, %v674
    %v676 = vrot.slane %v675, 2
    %v677 = vadd.f32 %v675, %v676
    %v678 = vrot.slane %v677, 1
    %v679 = vadd.f32 %v677, %v678
    %v680 = vsub.f32 %v72, 1.0
    %v681 = vsub.f32 %v73, 1.0
    %v682 = vsub.f32 %v74, 1.0
    %v683 = vsub.f32 %v75, 1.0
    %v684 = vsub.f32 %v76, 1.0
    %v685 = vsub.f32 %v77, 1.0
    %v686 = vsub.f32 %v78, 1.0
    %v687 = vsub.f32 %v79, 1.0
    %v688 = vmul.f32 %v70, %v680
    %v689 = vmul.f32 %v71, %v681
    %v690 = vmul.f32 %v70, %v682
    %v691 = vmul.f32 %v71, %v683
    %v692 = vmul.f32 %v70, %v684
    %v693 = vmul.f32 %v71, %v685
    %v694 = vmul.f32 %v70, %v686
    %v695 = vmul.f32 %v71, %v687
    %v696 = vsel %vm52, %v688, 0.0
    %v697 = vsel %vm54, %v689, 0.0
    %v698 = vadd.f32 %v696, %v697
    %v699 = vrot.slane %v698, 4
    %v700 = vadd.f32 %v698, %v699
    %v701 = vrot.slane %v700, 2
    %v702 = vadd.f32 %v700, %v701
    %v703 = vrot.slane %v702, 1
    %v704 = vadd.f32 %v702, %v703
    %v705 = vsel %vm52, %v690, 0.0
    %v706 = vsel %vm54, %v691, 0.0
    %v707 = vadd.f32 %v705, %v706
    %v708 = vrot.slane %v707, 4
    %v709 = vadd.f32 %v707, %v708
    %v710 = vrot.slane %v709, 2
    %v711 = vadd.f32 %v709, %v710
    %v712 = vrot.slane %v711, 1
    %v713 = vadd.f32 %v711, %v712
    %v714 = vsel %vm52, %v692, 0.0
    %v715 = vsel %vm54, %v693, 0.0
    %v716 = vadd.f32 %v714, %v715
    %v717 = vrot.slane %v716, 4
    %v718 = vadd.f32 %v716, %v717
    %v719 = vrot.slane %v718, 2
    %v720 = vadd.f32 %v718, %v719
    %v721 = vrot.slane %v720, 1
    %v722 = vadd.f32 %v720, %v721
    %v723 = vsel %vm52, %v694, 0.0
    %v724 = vsel %vm54, %v695, 0.0
    %v725 = vadd.f32 %v723, %v724
    %v726 = vrot.slane %v725, 4
    %v727 = vadd.f32 %v725, %v726
    %v728 = vrot.slane %v727, 2
    %v729 = vadd.f32 %v727, %v728
    %v730 = vrot.slane %v729, 1
    %v731 = vadd.f32 %v729, %v730
    %v732 = vadd.f32 %v704, 10.0
    %v733 = vadd.f32 %v713, 10.0
    %v734 = vadd.f32 %v722, 10.0
    %v735 = vadd.f32 %v731, 10.0
    %v736 = vmul.f32 %v70, %v564
    %v737 = vmul.f32 %v71, %v565
    %v738 = vmul.f32 %v70, %v566
    %v739 = vmul.f32 %v71, %v567
    %v740 = vmul.f32 %v70, %v568
    %v741 = vmul.f32 %v71, %v569
    %v742 = vmul.f32 %v70, %v570
    %v743 = vmul.f32 %v71, %v571
    %v744 = vsel %vm52, %v736, 0.0
    %v745 = vsel %vm54, %v737, 0.0
    %v746 = vadd.f32 %v744, %v745
    %v747 = vrot.slane %v746, 4
    %v748 = vadd.f32 %v746, %v747
    %v749 = vrot.slane %v748, 2
    %v750 = vadd.f32 %v748, %v749
    %v751 = vrot.slane %v750, 1
    %v752 = vadd.f32 %v750, %v751
    %v753 = vsel %vm52, %v738, 0.0
    %v754 = vsel %vm54, %v739, 0.0
    %v755 = vadd.f32 %v753, %v754
    %v756 = vrot.slane %v755, 4
    %v757 = vadd.f32 %v755, %v756
    %v758 = vrot.slane %v757, 2
    %v759 = vadd.f32 %v757, %v758
    %v760 = vrot.slane %v759, 1
    %v761 = vadd.f32 %v759, %v760
    %v762 = vsel %vm52, %v740, 0.0
    %v763 = vsel %vm54, %v741, 0.0
    %v764 = vadd.f32 %v762, %v763
    %v765 = vrot.slane %v764, 4
    %v766 = vadd.f32 %v764, %v765
    %v767 = vrot.slane %v766, 2
    %v768 = vadd.f32 %v766, %v767
    %v769 = vrot.slane %v768, 1
    %v770 = vadd.f32 %v768, %v769
    %v771 = vsel %vm52, %v742, 0.0
    %v772 = vsel %vm54, %v743, 0.0
    %v773 = vadd.f32 %v771, %v772
    %v774 = vrot.slane %v773, 4
    %v775 = vadd.f32 %v773, %v774
    %v776 = vrot.slane %v775, 2
    %v777 = vadd.f32 %v775, %v776
    %v778 = vrot.slane %v777, 1
    %v779 = vadd.f32 %v777, %v778
    %v780 = vadd.f32 %v732, 0.0
    %v781 = vadd.f32 %v733, 0.0
    %v782 = vadd.f32 %v734, 0.0
    %v783 = vadd.f32 %v735, 0.0
    %v784 = vrcp.pop %v780
    %v785 = vmul.f32 1.0, %v784
    %v786 = vrcp.pop %v781
    %v787 = vmul.f32 1.0, %v786
    %v788 = vrcp.pop %v782
    %v789 = vmul.f32 1.0, %v788
    %v790 = vrcp.pop %v783
    %v791 = vmul.f32 1.0, %v790
    %v792 = vmul.f32 %v785, %v785
    %v793 = vmul.f32 %v787, %v787
    %v794 = vmul.f32 %v789, %v789
    %v795 = vmul.f32 %v791, %v791
    %v796 = vlog2.pop %v780
    %v797 = vmul.f32 %v796, 0.6931472
    %v798 = vlog2.pop %v781
    %v799 = vmul.f32 %v798, 0.6931472
    %v800 = vlog2.pop %v782
    %v801 = vmul.f32 %v800, 0.6931472
    %v802 = vlog2.pop %v783
    %v803 = vmul.f32 %v802, 0.6931472
    %v804 = vmul.f32 %v785, 0.5
    %v805 = vmul.f32 %v787, 0.5
    %v806 = vmul.f32 %v789, 0.5
    %v807 = vmul.f32 %v791, 0.5
    %v808 = vsub.f32 %v797, %v804
    %v809 = vsub.f32 %v799, %v805
    %v810 = vsub.f32 %v801, %v806
    %v811 = vsub.f32 %v803, %v807
    %v812 = vmul.f32 %v792, 0.003968254
    %v813 = vmul.f32 %v793, 0.003968254
    %v814 = vmul.f32 %v794, 0.003968254
    %v815 = vmul.f32 %v795, 0.003968254
    %v816 = vsub.f32 0.008333334, %v812
    %v817 = vsub.f32 0.008333334, %v813
    %v818 = vsub.f32 0.008333334, %v814
    %v819 = vsub.f32 0.008333334, %v815
    %v820 = vmul.f32 %v792, %v816
    %v821 = vmul.f32 %v793, %v817
    %v822 = vmul.f32 %v794, %v818
    %v823 = vmul.f32 %v795, %v819
    %v824 = vsub.f32 0.083333336, %v820
    %v825 = vsub.f32 0.083333336, %v821
    %v826 = vsub.f32 0.083333336, %v822
    %v827 = vsub.f32 0.083333336, %v823
    %v828 = vmul.f32 %v792, %v824
    %v829 = vmul.f32 %v793, %v825
    %v830 = vmul.f32 %v794, %v826
    %v831 = vmul.f32 %v795, %v827
    %v832 = vsub.f32 %v808, %v828
    %v833 = vsub.f32 %v809, %v829
    %v834 = vsub.f32 %v810, %v830
    %v835 = vsub.f32 %v811, %v831
    %v836 = vsub.f32 %v780, 0.5
    %v837 = vsub.f32 %v781, 0.5
    %v838 = vsub.f32 %v782, 0.5
    %v839 = vsub.f32 %v783, 0.5
    %v840 = vmul.f32 %v836, %v797
    %v841 = vmul.f32 %v837, %v799
    %v842 = vmul.f32 %v838, %v801
    %v843 = vmul.f32 %v839, %v803
    %v844 = vsub.f32 %v840, %v780
    %v845 = vsub.f32 %v841, %v781
    %v846 = vsub.f32 %v842, %v782
    %v847 = vsub.f32 %v843, %v783
    %v848 = vadd.f32 %v844, 0.9189385
    %v849 = vadd.f32 %v845, 0.9189385
    %v850 = vadd.f32 %v846, 0.9189385
    %v851 = vadd.f32 %v847, 0.9189385
    %v852 = vmul.f32 %v792, 0.0007936508
    %v853 = vmul.f32 %v793, 0.0007936508
    %v854 = vmul.f32 %v794, 0.0007936508
    %v855 = vmul.f32 %v795, 0.0007936508
    %v856 = vsub.f32 0.0027777778, %v852
    %v857 = vsub.f32 0.0027777778, %v853
    %v858 = vsub.f32 0.0027777778, %v854
    %v859 = vsub.f32 0.0027777778, %v855
    %v860 = vmul.f32 %v792, %v856
    %v861 = vmul.f32 %v793, %v857
    %v862 = vmul.f32 %v794, %v858
    %v863 = vmul.f32 %v795, %v859
    %v864 = vsub.f32 0.083333336, %v860
    %v865 = vsub.f32 0.083333336, %v861
    %v866 = vsub.f32 0.083333336, %v862
    %v867 = vsub.f32 0.083333336, %v863
    %v868 = vmul.f32 %v785, %v864
    %v869 = vmul.f32 %v787, %v865
    %v870 = vmul.f32 %v789, %v866
    %v871 = vmul.f32 %v791, %v867
    %v872 = vadd.f32 %v848, %v868
    %v873 = vadd.f32 %v849, %v869
    %v874 = vadd.f32 %v850, %v870
    %v875 = vadd.f32 %v851, %v871
    %v876 = vsub.f32 %v872, %v752
    %v877 = vsub.f32 %v873, %v761
    %v878 = vsub.f32 %v874, %v770
    %v879 = vsub.f32 %v875, %v779
    %v880 = vsub.f32 %v876, 12.801827
    %v881 = vsub.f32 %v877, 12.801827
    %v882 = vsub.f32 %v878, 12.801827
    %v883 = vsub.f32 %v879, 12.801827
    %v884 = vsub.f32 %v460, %v832
    %v885 = vsub.f32 %v461, %v832
    %v886 = vsub.f32 %v462, %v833
    %v887 = vsub.f32 %v463, %v833
    %v888 = vsub.f32 %v464, %v834
    %v889 = vsub.f32 %v465, %v834
    %v890 = vsub.f32 %v466, %v835
    %v891 = vsub.f32 %v467, %v835
    %v892 = vmul.f32 %v688, %v884
    %v893 = vmul.f32 %v689, %v885
    %v894 = vmul.f32 %v690, %v886
    %v895 = vmul.f32 %v691, %v887
    %v896 = vmul.f32 %v692, %v888
    %v897 = vmul.f32 %v693, %v889
    %v898 = vmul.f32 %v694, %v890
    %v899 = vmul.f32 %v695, %v891
    %v900 = vsel %vm52, %v892, 0.0
    %v901 = vsel %vm54, %v893, 0.0
    %v902 = vadd.f32 %v900, %v901
    %v903 = vrot.slane %v902, 4
    %v904 = vadd.f32 %v902, %v903
    %v905 = vrot.slane %v904, 2
    %v906 = vadd.f32 %v904, %v905
    %v907 = vrot.slane %v906, 1
    %v908 = vadd.f32 %v906, %v907
    %v909 = vsel %vm52, %v894, 0.0
    %v910 = vsel %vm54, %v895, 0.0
    %v911 = vadd.f32 %v909, %v910
    %v912 = vrot.slane %v911, 4
    %v913 = vadd.f32 %v911, %v912
    %v914 = vrot.slane %v913, 2
    %v915 = vadd.f32 %v913, %v914
    %v916 = vrot.slane %v915, 1
    %v917 = vadd.f32 %v915, %v916
    %v918 = vsel %vm52, %v896, 0.0
    %v919 = vsel %vm54, %v897, 0.0
    %v920 = vadd.f32 %v918, %v919
    %v921 = vrot.slane %v920, 4
    %v922 = vadd.f32 %v920, %v921
    %v923 = vrot.slane %v922, 2
    %v924 = vadd.f32 %v922, %v923
    %v925 = vrot.slane %v924, 1
    %v926 = vadd.f32 %v924, %v925
    %v927 = vsel %vm52, %v898, 0.0
    %v928 = vsel %vm54, %v899, 0.0
    %v929 = vadd.f32 %v927, %v928
    %v930 = vrot.slane %v929, 4
    %v931 = vadd.f32 %v929, %v930
    %v932 = vrot.slane %v931, 2
    %v933 = vadd.f32 %v931, %v932
    %v934 = vrot.slane %v933, 1
    %v935 = vadd.f32 %v933, %v934
    %v936 = vadd.f32 %v880, %v908
    %v937 = vadd.f32 %v881, %v917
    %v938 = vadd.f32 %v882, %v926
    %v939 = vadd.f32 %v883, %v935
    %v940 = vstv %s36
    %v941 = vmul.f32 %v940, %v936
    %v942 = vmul.f32 %v940, %v937
    %v943 = vmul.f32 %v940, %v938
    %v944 = vmul.f32 %v940, %v939
    %v945 = vadd.f32 %v652, %v941
    %v946 = vadd.f32 %v661, %v942
    %v947 = vadd.f32 %v670, %v943
    %v948 = vadd.f32 %v679, %v944
    %v949 = vsel %vm52, %v945, 0.0
    %v950 = vsel %vm52, %v946, 0.0
    %v951 = vadd.f32 %v949, %v950
    %v952 = vsel %vm52, %v947, 0.0
    %v953 = vadd.f32 %v951, %v952
    %v954 = vsel %vm52, %v948, 0.0
    %v955 = vadd.f32 %v953, %v954
    %v956 = vmul.f32 %v955, 0.25
    %v957 = vrcp.pop %v88
    %v958 = vmul.f32 1.0, %v957
    %v959 = vrcp.pop %v97
    %v960 = vmul.f32 1.0, %v959
    %v961 = vrcp.pop %v106
    %v962 = vmul.f32 1.0, %v961
    %v963 = vmul.f32 %v72, %v958
    %v964 = vmul.f32 %v73, %v958
    %v965 = vmul.f32 %v74, %v960
    %v966 = vmul.f32 %v75, %v960
    %v967 = vmul.f32 %v76, %v962
    %v968 = vmul.f32 %v77, %v962
    %v969 = vmul.f32 %v958, 10.0
    %v970 = vmul.f32 %v960, 10.0
    %v971 = vmul.f32 %v962, 10.0
    %v972 = vsub.f32 1.0, %v969
    %v973 = vsub.f32 1.0, %v970
    %v974 = vsub.f32 1.0, %v971
    %v975 = vsub.f32 %v963, %v963
    %v976 = vsub.f32 %v964, %v964
    %v977 = vsub.f32 %v965, %v963
    %v978 = vsub.f32 %v966, %v964
    %v979 = vsub.f32 %v967, %v963
    %v980 = vsub.f32 %v968, %v964
    %v981 = vand.u32 2147483647, %v975
    %v982 = vand.u32 2147483647, %v976
    %v983 = vand.u32 2147483647, %v977
    %v984 = vand.u32 2147483647, %v978
    %v985 = vand.u32 2147483647, %v979
    %v986 = vand.u32 2147483647, %v980
    %v987 = vsel %vm52, %v981, 0.0
    %v988 = vsel %vm54, %v982, 0.0
    %v989 = vadd.f32 %v987, %v988
    %v990 = vrot.slane %v989, 4
    %v991 = vadd.f32 %v989, %v990
    %v992 = vrot.slane %v991, 2
    %v993 = vadd.f32 %v991, %v992
    %v994 = vrot.slane %v993, 1
    %v995 = vadd.f32 %v993, %v994
    %v996 = vsel %vm52, %v983, 0.0
    %v997 = vsel %vm54, %v984, 0.0
    %v998 = vadd.f32 %v996, %v997
    %v999 = vrot.slane %v998, 4
    %v1000 = vadd.f32 %v998, %v999
    %v1001 = vrot.slane %v1000, 2
    %v1002 = vadd.f32 %v1000, %v1001
    %v1003 = vrot.slane %v1002, 1
    %v1004 = vadd.f32 %v1002, %v1003
    %v1005 = vsel %vm52, %v985, 0.0
    %v1006 = vsel %vm54, %v986, 0.0
    %v1007 = vadd.f32 %v1005, %v1006
    %v1008 = vrot.slane %v1007, 4
    %v1009 = vadd.f32 %v1007, %v1008
    %v1010 = vrot.slane %v1009, 2
    %v1011 = vadd.f32 %v1009, %v1010
    %v1012 = vrot.slane %v1011, 1
    %v1013 = vadd.f32 %v1011, %v1012
    %v1014 = vmul.f32 %v995, 0.25
    %v1015 = vmul.f32 %v1004, 0.25
    %v1016 = vmul.f32 %v1013, 0.25
    %v1017 = vmul.f32 %v972, %v972
    %v1018 = vmul.f32 %v973, %v972
    %v1019 = vmul.f32 %v974, %v972
    %v1020 = vmul.f32 %v1014, %v1017
    %v1021 = vmul.f32 %v1015, %v1018
    %v1022 = vmul.f32 %v1016, %v1019
    %v1023 = vsel %vm52, %v1020, 0.0
    %v1024 = vsel %vm52, %v1021, 0.0
    %v1025 = vadd.f32 %v1023, %v1024
    %v1026 = vsel %vm52, %v1022, 0.0
    %v1027 = vadd.f32 %v1025, %v1026
    %v1028 = vadd.f32 %v1027, 0.0
    %v1029 = vsub.f32 %v963, %v965
    %v1030 = vsub.f32 %v964, %v966
    %v1031 = vsub.f32 %v965, %v965
    %v1032 = vsub.f32 %v966, %v966
    %v1033 = vsub.f32 %v967, %v965
    %v1034 = vsub.f32 %v968, %v966
    %v1035 = vand.u32 2147483647, %v1029
    %v1036 = vand.u32 2147483647, %v1030
    %v1037 = vand.u32 2147483647, %v1031
    %v1038 = vand.u32 2147483647, %v1032
    %v1039 = vand.u32 2147483647, %v1033
    %v1040 = vand.u32 2147483647, %v1034
    %v1041 = vsel %vm52, %v1035, 0.0
    %v1042 = vsel %vm54, %v1036, 0.0
    %v1043 = vadd.f32 %v1041, %v1042
    %v1044 = vrot.slane %v1043, 4
    %v1045 = vadd.f32 %v1043, %v1044
    %v1046 = vrot.slane %v1045, 2
    %v1047 = vadd.f32 %v1045, %v1046
    %v1048 = vrot.slane %v1047, 1
    %v1049 = vadd.f32 %v1047, %v1048
    %v1050 = vsel %vm52, %v1037, 0.0
    %v1051 = vsel %vm54, %v1038, 0.0
    %v1052 = vadd.f32 %v1050, %v1051
    %v1053 = vrot.slane %v1052, 4
    %v1054 = vadd.f32 %v1052, %v1053
    %v1055 = vrot.slane %v1054, 2
    %v1056 = vadd.f32 %v1054, %v1055
    %v1057 = vrot.slane %v1056, 1
    %v1058 = vadd.f32 %v1056, %v1057
    %v1059 = vsel %vm52, %v1039, 0.0
    %v1060 = vsel %vm54, %v1040, 0.0
    %v1061 = vadd.f32 %v1059, %v1060
    %v1062 = vrot.slane %v1061, 4
    %v1063 = vadd.f32 %v1061, %v1062
    %v1064 = vrot.slane %v1063, 2
    %v1065 = vadd.f32 %v1063, %v1064
    %v1066 = vrot.slane %v1065, 1
    %v1067 = vadd.f32 %v1065, %v1066
    %v1068 = vmul.f32 %v1049, 0.25
    %v1069 = vmul.f32 %v1058, 0.25
    %v1070 = vmul.f32 %v1067, 0.25
    %v1071 = vmul.f32 %v973, %v973
    %v1072 = vmul.f32 %v974, %v973
    %v1073 = vmul.f32 %v1068, %v1018
    %v1074 = vmul.f32 %v1069, %v1071
    %v1075 = vmul.f32 %v1070, %v1072
    %v1076 = vsel %vm52, %v1073, 0.0
    %v1077 = vsel %vm52, %v1074, 0.0
    %v1078 = vadd.f32 %v1076, %v1077
    %v1079 = vsel %vm52, %v1075, 0.0
    %v1080 = vadd.f32 %v1078, %v1079
    %v1081 = vadd.f32 %v1028, %v1080
    %v1082 = vsub.f32 %v963, %v967
    %v1083 = vsub.f32 %v964, %v968
    %v1084 = vsub.f32 %v965, %v967
    %v1085 = vsub.f32 %v966, %v968
    %v1086 = vsub.f32 %v967, %v967
    %v1087 = vsub.f32 %v968, %v968
    %v1088 = vand.u32 2147483647, %v1082
    %v1089 = vand.u32 2147483647, %v1083
    %v1090 = vand.u32 2147483647, %v1084
    %v1091 = vand.u32 2147483647, %v1085
    %v1092 = vand.u32 2147483647, %v1086
    %v1093 = vand.u32 2147483647, %v1087
    %v1094 = vsel %vm52, %v1088, 0.0
    %v1095 = vsel %vm54, %v1089, 0.0
    %v1096 = vadd.f32 %v1094, %v1095
    %v1097 = vrot.slane %v1096, 4
    %v1098 = vadd.f32 %v1096, %v1097
    %v1099 = vrot.slane %v1098, 2
    %v1100 = vadd.f32 %v1098, %v1099
    %v1101 = vrot.slane %v1100, 1
    %v1102 = vadd.f32 %v1100, %v1101
    %v1103 = vsel %vm52, %v1090, 0.0
    %v1104 = vsel %vm54, %v1091, 0.0
    %v1105 = vadd.f32 %v1103, %v1104
    %v1106 = vrot.slane %v1105, 4
    %v1107 = vadd.f32 %v1105, %v1106
    %v1108 = vrot.slane %v1107, 2
    %v1109 = vadd.f32 %v1107, %v1108
    %v1110 = vrot.slane %v1109, 1
    %v1111 = vadd.f32 %v1109, %v1110
    %v1112 = vsel %vm52, %v1092, 0.0
    %v1113 = vsel %vm54, %v1093, 0.0
    %v1114 = vadd.f32 %v1112, %v1113
    %v1115 = vrot.slane %v1114, 4
    %v1116 = vadd.f32 %v1114, %v1115
    %v1117 = vrot.slane %v1116, 2
    %v1118 = vadd.f32 %v1116, %v1117
    %v1119 = vrot.slane %v1118, 1
    %v1120 = vadd.f32 %v1118, %v1119
    %v1121 = vmul.f32 %v1102, 0.25
    %v1122 = vmul.f32 %v1111, 0.25
    %v1123 = vmul.f32 %v1120, 0.25
    %v1124 = vmul.f32 %v974, %v974
    %v1125 = vmul.f32 %v1121, %v1019
    %v1126 = vmul.f32 %v1122, %v1072
    %v1127 = vmul.f32 %v1123, %v1124
    %v1128 = vsel %vm52, %v1125, 0.0
    %v1129 = vsel %vm52, %v1126, 0.0
    %v1130 = vadd.f32 %v1128, %v1129
    %v1131 = vsel %vm52, %v1127, 0.0
    %v1132 = vadd.f32 %v1130, %v1131
    %v1133 = vadd.f32 %v1081, %v1132
    %v1134 = vstv %s37
    %v1135 = vmul.f32 %v1134, %v1133
    %v1136 = vadd.f32 %v956, %v1135
    %vm1137 = vcmask 57344
    %1138 = vst.msk [vmem:[#allocation5] sm:$0x1] %vm1137, %v1136
    // Predicated region
    $region26: #{tpu_custom_call.1} parent=1 // pred_check
      _
    $region27: #{tpu_custom_call.1} parent=1 // pred_check_branch
      %1140 = sbr.rel (0) target = $region29
    $region28: #{tpu_custom_call.1} parent=1 // pred_region
      _
    $region29: #{tpu_custom_call.1} parent=1 // pred_fallthru
      _
    // Predicated region
    $region30: #{tpu_custom_call.1} parent=1 // pred_check
      _
    $region31: #{tpu_custom_call.1} parent=1 // pred_check_branch
      %1142 = sbr.rel (0) target = $region33
    $region32: #{tpu_custom_call.1} parent=1 // pred_region
      %s1144 = ssub.s32 16, 16
      %1145 = vsyncadd [#allocation3], %s1144
      %s1147 = sshll.u32 [#allocation5], 4
      %s1148 = int_to_ptr.vmem [resolvable:$true] %s1147
      %1150 = dma.vmem_to_hbm [thread:$0]  %s1148, 16, %s6, [#allocation3]
    $region33: #{tpu_custom_call.1} parent=1 // pred_fallthru
      _
    // Predicated region
    $region34: #{tpu_custom_call.1} parent=1 // pred_check
      _
    $region35: #{tpu_custom_call.1} parent=1 // pred_check_branch
      %1152 = sbr.rel (0) target = $region37
    $region36: #{tpu_custom_call.1} parent=1 // pred_region
      _
    $region37: #{tpu_custom_call.1} parent=1 // pred_fallthru
      _
    // Predicated region
    $region38: #{tpu_custom_call.1} parent=1 // pred_check
      _
    $region39: #{tpu_custom_call.1} parent=1 // pred_check_branch
      %1154 = sbr.rel (0) target = $region41
    $region40: #{tpu_custom_call.1} parent=1 // pred_region
      %1155 = dma.done [#allocation3], 16
    $region41: #{tpu_custom_call.1} parent=1 // pred_fallthru
      _
    %1156 = vsyncpa [#allocation3], 1
    %1157 = vsyncpa [#allocation4], 1

</llo_original>
